<compile_context>
chip_gen: v5e
topology: v5e:2x2
jax: 0.10.0
libtpu: 0.0.40
codegen_flags: <defaults>
</compile_context>

<pallas_src>
import functools

import jax
import jax.numpy as jnp
from jax import lax
from jax.experimental import pallas as pl
from jax.experimental.pallas import tpu as pltpu


# ----------------------------- fused Pallas kernel -----------------------------


def _smma_fused_kernel(
    q_ref, k_ref, v_ref,
    wq_ref, bq_ref, wk_ref, bk_ref, wv_ref, bv_ref,
    wl_ref, bl_ref, g_ref, beta_ref,
    out_ref, alpha_ref,
    alpha_scratch, cv_scratch,
    *, n_head, d_k, d_v, eps,
):
    f32 = jnp.float32
    bf16 = jnp.bfloat16

    # Per-batch activations (bf16 for the MXU, f32 accumulation).
    xq = q_ref[0].astype(bf16)          # [Lq, C]
    xk = k_ref[0].astype(bf16)          # [Lk, C]
    xv = v_ref[0].astype(bf16)          # [Lk, C]

    # Q/K/V projections. 1/temperature is already folded into wq/bq.
    # Cast to bf16 ONCE here; per-head slices below are plain bf16 slices.
    qp = (jnp.dot(xq, wq_ref[...], preferred_element_type=f32) + bq_ref[...]).astype(bf16)
    kp = (jnp.dot(xk, wk_ref[...], preferred_element_type=f32) + bk_ref[...]).astype(bf16)
    vp = (jnp.dot(xv, wv_ref[...], preferred_element_type=f32) + bv_ref[...]).astype(bf16)

    # Contract d_k of both operands -> MXU trans_b, no k.T materialized.
    dn = (((1,), (1,)), ((), ()))

    # TODO(synk): mask / query_mask and the is_tunable stepwise-monotonic
    # expectation recurrence are not implemented (None/False in this eval path).
    best_num = None
    best_idx = None
    for h in range(n_head):             # static unrolled loop over heads
        q_h = qp[:, h * d_k:(h + 1) * d_k]      # [Lq, d_k] bf16
        k_h = kp[:, h * d_k:(h + 1) * d_k]      # [Lk, d_k] bf16
        v_h = vp[:, h * d_v:(h + 1) * d_v]      # [Lk, d_v] bf16

        e = lax.dot_general(q_h, k_h, dn, preferred_element_type=f32)   # [Lq, Lk]
        m = jnp.max(e, axis=-1, keepdims=True)
        p = jnp.exp(e - m)
        s = jnp.sum(p, axis=-1, keepdims=True)
        a = p * pl.reciprocal(s, approx=True)    # softmax over klen, f32 (EUP recip)

        # Direct per-head stores (no register concatenation over heads).
        alpha_scratch[h] = a
        cv_scratch[:, h * d_v:(h + 1) * d_v] = jnp.dot(
            a.astype(bf16), v_h, preferred_element_type=f32)            # [Lq, d_v]

        # Focus-rate numerator for this head: sum_k max_q alpha  (scalar).
        num_h = jnp.sum(jnp.max(a, axis=0, keepdims=True))
        if h == 0:
            best_num = num_h
            best_idx = jnp.int32(0)
        else:
            better = num_h > best_num
            best_num = jnp.where(better, num_h, best_num)
            best_idx = jnp.where(better, jnp.int32(h), best_idx)

    # Only the selected head's alpha goes back to HBM.
    alpha_ref[0] = alpha_scratch[best_idx]

    # last_layer + LayerNorm (dropout is identity in eval mode).
    cv = cv_scratch[...]                                                # [Lq, H*d_v] f32
    y = jnp.dot(cv.astype(bf16), wl_ref[...], preferred_element_type=f32) + bl_ref[...]
    mean = jnp.mean(y, axis=-1, keepdims=True)
    var = jnp.mean(jnp.square(y - mean), axis=-1, keepdims=True)
    yn = (y - mean) * lax.rsqrt(var + eps)
    out_ref[0] = (yn * g_ref[...] + beta_ref[...]).astype(out_ref.dtype)


# ----------------------------- wrapper -----------------------------


def smma_forward(params, q, k, v, mel_len, *, n_head, d_k, d_v):
    B, Lq, C = q.shape
    Lk = k.shape[1]
    HK = n_head * d_k
    HV = n_head * d_v

    kernel = functools.partial(
        _smma_fused_kernel, n_head=n_head, d_k=d_k, d_v=d_v, eps=1e-5,
    )

    def rep(shape):
        # Replicated (grid-invariant) operand: always block (0, 0, ...).
        return pl.BlockSpec(shape, lambda b: (0,) * len(shape))

    out, alpha_fc = pl.pallas_call(
        kernel,
        out_shape=(
            jax.ShapeDtypeStruct((B, Lq, C), jnp.float32),
            jax.ShapeDtypeStruct((B, Lq, Lk), jnp.float32),   # selected head only
        ),
        grid=(B,),
        in_specs=[
            pl.BlockSpec((1, Lq, C), lambda b: (b, 0, 0)),
            pl.BlockSpec((1, Lk, C), lambda b: (b, 0, 0)),
            pl.BlockSpec((1, Lk, C), lambda b: (b, 0, 0)),
            rep((C, HK)), rep((1, HK)),
            rep((C, HK)), rep((1, HK)),
            rep((C, HV)), rep((1, HV)),
            rep((HV, C)), rep((1, C)),
            rep((1, C)), rep((1, C)),
        ],
        out_specs=(
            pl.BlockSpec((1, Lq, C), lambda b: (b, 0, 0)),
            pl.BlockSpec((1, Lq, Lk), lambda b: (b, 0, 0)),
        ),
        scratch_shapes=[
            pltpu.VMEM((n_head, Lq, Lk), jnp.float32),   # per-head alpha (head select)
            pltpu.VMEM((Lq, HV), jnp.float32),           # lane-dense cv slab
        ],
        compiler_params=pltpu.CompilerParams(
            dimension_semantics=("parallel",),
            vmem_limit_bytes=32 * 1024 * 1024,
        ),
    )(
        q, k, v,
        params["w_qs"], params["b_qs"],
        params["w_ks"], params["b_ks"],
        params["w_vs"], params["b_vs"],
        params["w_last"], params["b_last"],
        params["ln_g"], params["ln_b"],
    )

    # Tiny epilogue: focus rate of the already-selected head, averaged over batch.
    focus_sel = jnp.max(alpha_fc, axis=1).sum(axis=-1) / mel_len        # [B]
    fr_max = jnp.mean(focus_sel)

    return out, alpha_fc, fr_max


# ----------------------------- parameter init -----------------------------


def init_params(key, d_model, d_k, d_v, n_head):
    ks = jax.random.split(key, 8)
    s = 0.1
    bf16 = jnp.bfloat16
    inv_temp = 1.0 / (float(d_k) ** 0.5)   # folded into w_qs / b_qs (no per-step mul)
    # Matmul weights stored bf16, pre-transposed to (in, out); biases/LN in f32.
    return {
        "w_qs": (s * inv_temp * jax.random.normal(ks[0], (d_model, n_head * d_k), jnp.float32)).astype(bf16),
        "b_qs": (s * inv_temp * jax.random.normal(ks[1], (1, n_head * d_k), jnp.float32)),
        "w_ks": (s * jax.random.normal(ks[2], (d_model, n_head * d_k), jnp.float32)).astype(bf16),
        "b_ks": s * jax.random.normal(ks[3], (1, n_head * d_k), jnp.float32),
        "w_vs": (s * jax.random.normal(ks[4], (d_model, n_head * d_v), jnp.float32)).astype(bf16),
        "b_vs": s * jax.random.normal(ks[5], (1, n_head * d_v), jnp.float32),
        "w_last": (s * jax.random.normal(ks[6], (n_head * d_v, d_model), jnp.float32)).astype(bf16),
        "b_last": s * jax.random.normal(ks[7], (1, d_model), jnp.float32),
        "ln_g": jnp.ones((1, d_model), jnp.float32),   # PyTorch LayerNorm defaults
        "ln_b": jnp.zeros((1, d_model), jnp.float32),
    }


# --------------------------------- main -----------------------------------

if __name__ == "__main__":
    d_model, d_k, d_v, n_head = 32, 8, 8, 8
    batch, qlen, klen = 2, 8, 16

    key = jax.random.PRNGKey(0)
    kp_, kq, kk, kv = jax.random.split(key, 4)
    params = init_params(kp_, d_model, d_k, d_v, n_head)

    q = jax.random.normal(kq, (batch, qlen, d_model), jnp.float32)
    k = jax.random.normal(kk, (batch, klen, d_model), jnp.float32)
    v = jax.random.normal(kv, (batch, klen, d_model), jnp.float32)
    mel_len = jnp.array([float(klen), float(klen - 4)], jnp.float32)

    fwd = jax.jit(
        functools.partial(smma_forward, n_head=n_head, d_k=d_k, d_v=d_v)
    )
    out, alpha_fc, fr_max = fwd(params, q, k, v, mel_len)
    jax.block_until_ready((out, alpha_fc, fr_max))

    assert out.shape == (batch, qlen, d_model)
    assert alpha_fc.shape == (batch, qlen, klen)
    assert fr_max.shape == ()
    assert bool(jnp.all(jnp.isfinite(out)))
    assert bool(jnp.all(jnp.isfinite(alpha_fc)))
    assert bool(jnp.isfinite(fr_max)) and float(fr_max) > 0.0
    # softmax rows should sum to ~1 (approx EUP reciprocal -> loose tolerance)
    assert bool(jnp.all(jnp.abs(alpha_fc.sum(-1) - 1.0) < 0.05))
    print("KERNEL_OK")
</pallas_src>

<mosaic_0001>
module attributes {stable_mosaic.version = 11 : i64} {
  func.func @_smma_fused_kernel(%arg0: i32, %arg1: memref<1x8x32xf32, #tpu.memory_space<vmem>>, %arg2: memref<1x16x32xf32, #tpu.memory_space<vmem>>, %arg3: memref<1x16x32xf32, #tpu.memory_space<vmem>>, %arg4: memref<32x64xbf16, #tpu.memory_space<vmem>>, %arg5: memref<1x64xf32, #tpu.memory_space<vmem>>, %arg6: memref<32x64xbf16, #tpu.memory_space<vmem>>, %arg7: memref<1x64xf32, #tpu.memory_space<vmem>>, %arg8: memref<32x64xbf16, #tpu.memory_space<vmem>>, %arg9: memref<1x64xf32, #tpu.memory_space<vmem>>, %arg10: memref<64x32xbf16, #tpu.memory_space<vmem>>, %arg11: memref<1x32xf32, #tpu.memory_space<vmem>>, %arg12: memref<1x32xf32, #tpu.memory_space<vmem>>, %arg13: memref<1x32xf32, #tpu.memory_space<vmem>>, %arg14: memref<1x8x32xf32, #tpu.memory_space<vmem>>, %arg15: memref<1x8x16xf32, #tpu.memory_space<vmem>>, %arg16: memref<8x8x16xf32, #tpu.memory_space<vmem>>, %arg17: memref<8x64xf32, #tpu.memory_space<vmem>>) attributes {dimension_semantics = [#tpu.dimension_semantics<parallel>], iteration_bounds = array<i64: 2>, scalar_prefetch = 0 : i64, scratch_operands = 2 : i64, tpu.core_type = #tpu.core_type<tc>, window_params = [{transform_indices = @transform_0, window_bounds = array<i64: 1, 8, 32>}, {transform_indices = @transform_1, window_bounds = array<i64: 1, 16, 32>}, {transform_indices = @transform_2, window_bounds = array<i64: 1, 16, 32>}, {pipeline_mode = #tpu.pipeline_mode<synchronous>, transform_indices = @transform_3, window_bounds = array<i64: 32, 64>}, {pipeline_mode = #tpu.pipeline_mode<synchronous>, transform_indices = @transform_4, window_bounds = array<i64: 1, 64>}, {pipeline_mode = #tpu.pipeline_mode<synchronous>, transform_indices = @transform_5, window_bounds = array<i64: 32, 64>}, {pipeline_mode = #tpu.pipeline_mode<synchronous>, transform_indices = @transform_6, window_bounds = array<i64: 1, 64>}, {pipeline_mode = #tpu.pipeline_mode<synchronous>, transform_indices = @transform_7, window_bounds = array<i64: 32, 64>}, {pipeline_mode = #tpu.pipeline_mode<synchronous>, transform_indices = @transform_8, window_bounds = array<i64: 1, 64>}, {pipeline_mode = #tpu.pipeline_mode<synchronous>, transform_indices = @transform_9, window_bounds = array<i64: 64, 32>}, {pipeline_mode = #tpu.pipeline_mode<synchronous>, transform_indices = @transform_10, window_bounds = array<i64: 1, 32>}, {pipeline_mode = #tpu.pipeline_mode<synchronous>, transform_indices = @transform_11, window_bounds = array<i64: 1, 32>}, {pipeline_mode = #tpu.pipeline_mode<synchronous>, transform_indices = @transform_12, window_bounds = array<i64: 1, 32>}, {transform_indices = @transform_13, window_bounds = array<i64: 1, 8, 32>}, {transform_indices = @transform_14, window_bounds = array<i64: 1, 8, 16>}]} {
    %c0 = arith.constant 0 : index
    %c0_0 = arith.constant 0 : index
    %c0_1 = arith.constant 0 : index
    %0 = vector.load %arg1[%c0, %c0_0, %c0_1] : memref<1x8x32xf32, #tpu.memory_space<vmem>>, vector<1x8x32xf32>
    %1 = vector.shape_cast %0 : vector<1x8x32xf32> to vector<8x32xf32>
    %2 = arith.truncf %1 : vector<8x32xf32> to vector<8x32xbf16>
    %c0_2 = arith.constant 0 : index
    %c0_3 = arith.constant 0 : index
    %c0_4 = arith.constant 0 : index
    %3 = vector.load %arg2[%c0_2, %c0_3, %c0_4] : memref<1x16x32xf32, #tpu.memory_space<vmem>>, vector<1x16x32xf32>
    %4 = vector.shape_cast %3 : vector<1x16x32xf32> to vector<16x32xf32>
    %5 = arith.truncf %4 : vector<16x32xf32> to vector<16x32xbf16>
    %c0_5 = arith.constant 0 : index
    %c0_6 = arith.constant 0 : index
    %c0_7 = arith.constant 0 : index
    %6 = vector.load %arg3[%c0_5, %c0_6, %c0_7] : memref<1x16x32xf32, #tpu.memory_space<vmem>>, vector<1x16x32xf32>
    %7 = vector.shape_cast %6 : vector<1x16x32xf32> to vector<16x32xf32>
    %8 = arith.truncf %7 : vector<16x32xf32> to vector<16x32xbf16>
    %c0_8 = arith.constant 0 : index
    %c0_9 = arith.constant 0 : index
    %9 = vector.load %arg4[%c0_8, %c0_9] : memref<32x64xbf16, #tpu.memory_space<vmem>>, vector<32x64xbf16>
    %cst = arith.constant dense<0.000000e+00> : vector<8x64xf32>
    %10 = tpu.matmul %2, %9, %cst {dimension_numbers = #tpu.dot_dimension_numbers<[1], [0], [0], [1], [0, 0, 1, 1], [], []>} : vector<8x32xbf16>, vector<32x64xbf16>, vector<8x64xf32> -> vector<8x64xf32>
    %c0_10 = arith.constant 0 : index
    %c0_11 = arith.constant 0 : index
    %11 = vector.load %arg5[%c0_10, %c0_11] : memref<1x64xf32, #tpu.memory_space<vmem>>, vector<1x64xf32>
    %12 = vector.broadcast %11 : vector<1x64xf32> to vector<8x64xf32>
    %13 = arith.addf %10, %12 : vector<8x64xf32>
    %14 = arith.truncf %13 : vector<8x64xf32> to vector<8x64xbf16>
    %c0_12 = arith.constant 0 : index
    %c0_13 = arith.constant 0 : index
    %15 = vector.load %arg6[%c0_12, %c0_13] : memref<32x64xbf16, #tpu.memory_space<vmem>>, vector<32x64xbf16>
    %cst_14 = arith.constant dense<0.000000e+00> : vector<16x64xf32>
    %16 = tpu.matmul %5, %15, %cst_14 {dimension_numbers = #tpu.dot_dimension_numbers<[1], [0], [0], [1], [0, 0, 1, 1], [], []>} : vector<16x32xbf16>, vector<32x64xbf16>, vector<16x64xf32> -> vector<16x64xf32>
    %c0_15 = arith.constant 0 : index
    %c0_16 = arith.constant 0 : index
    %17 = vector.load %arg7[%c0_15, %c0_16] : memref<1x64xf32, #tpu.memory_space<vmem>>, vector<1x64xf32>
    %18 = vector.broadcast %17 : vector<1x64xf32> to vector<16x64xf32>
    %19 = arith.addf %16, %18 : vector<16x64xf32>
    %20 = arith.truncf %19 : vector<16x64xf32> to vector<16x64xbf16>
    %c0_17 = arith.constant 0 : index
    %c0_18 = arith.constant 0 : index
    %21 = vector.load %arg8[%c0_17, %c0_18] : memref<32x64xbf16, #tpu.memory_space<vmem>>, vector<32x64xbf16>
    %cst_19 = arith.constant dense<0.000000e+00> : vector<16x64xf32>
    %22 = tpu.matmul %8, %21, %cst_19 {dimension_numbers = #tpu.dot_dimension_numbers<[1], [0], [0], [1], [0, 0, 1, 1], [], []>} : vector<16x32xbf16>, vector<32x64xbf16>, vector<16x64xf32> -> vector<16x64xf32>
    %c0_20 = arith.constant 0 : index
    %c0_21 = arith.constant 0 : index
    %23 = vector.load %arg9[%c0_20, %c0_21] : memref<1x64xf32, #tpu.memory_space<vmem>>, vector<1x64xf32>
    %24 = vector.broadcast %23 : vector<1x64xf32> to vector<16x64xf32>
    %25 = arith.addf %22, %24 : vector<16x64xf32>
    %26 = arith.truncf %25 : vector<16x64xf32> to vector<16x64xbf16>
    %27 = vector.extract_strided_slice %14 {offsets = [0, 0], sizes = [8, 8], strides = [1, 1]} : vector<8x64xbf16> to vector<8x8xbf16>
    %28 = vector.extract_strided_slice %20 {offsets = [0, 0], sizes = [16, 8], strides = [1, 1]} : vector<16x64xbf16> to vector<16x8xbf16>
    %29 = vector.extract_strided_slice %26 {offsets = [0, 0], sizes = [16, 8], strides = [1, 1]} : vector<16x64xbf16> to vector<16x8xbf16>
    %cst_22 = arith.constant dense<0.000000e+00> : vector<8x16xf32>
    %30 = tpu.matmul %27, %28, %cst_22 {dimension_numbers = #tpu.dot_dimension_numbers<[1], [1], [0], [0], [0, 0, 1, 0], [], []>} : vector<8x8xbf16>, vector<16x8xbf16>, vector<8x16xf32> -> vector<8x16xf32>
    %cst_23 = arith.constant dense<0xFF800000> : vector<8xf32>
    %31 = vector.multi_reduction <maximumf>, %30, %cst_23 [1] : vector<8x16xf32> to vector<8xf32>
    %32 = vector.shape_cast %31 : vector<8xf32> to vector<8x1xf32>
    %33 = vector.broadcast %32 : vector<8x1xf32> to vector<8x16xf32>
    %34 = arith.subf %30, %33 : vector<8x16xf32>
    %35 = math.exp %34 : vector<8x16xf32>
    %cst_24 = arith.constant dense<0.000000e+00> : vector<8xf32>
    %36 = vector.multi_reduction <add>, %35, %cst_24 [1] : vector<8x16xf32> to vector<8xf32>
    %37 = vector.shape_cast %36 : vector<8xf32> to vector<8x1xf32>
    %38 = tpu.reciprocal %37 {approx = true} : vector<8x1xf32> -> vector<8x1xf32>
    %39 = vector.broadcast %38 : vector<8x1xf32> to vector<8x16xf32>
    %40 = arith.mulf %35, %39 : vector<8x16xf32>
    %c0_25 = arith.constant 0 : index
    %c0_26 = arith.constant 0 : index
    %c0_27 = arith.constant 0 : index
    %41 = vector.load %arg16[%c0_25, %c0_26, %c0_27] : memref<8x8x16xf32, #tpu.memory_space<vmem>>, vector<1x8x16xf32>
    %42 = vector.shape_cast %41 : vector<1x8x16xf32> to vector<8x16xf32>
    %43 = vector.shape_cast %40 : vector<8x16xf32> to vector<1x8x16xf32>
    tpu.vector_store %arg16[%c0_25, %c0_26, %c0_27], %43 {strides = array<i32>} : memref<8x8x16xf32, #tpu.memory_space<vmem>>, vector<1x8x16xf32>,
    %44 = arith.truncf %40 : vector<8x16xf32> to vector<8x16xbf16>
    %cst_28 = arith.constant dense<0.000000e+00> : vector<8x8xf32>
    %45 = tpu.matmul %44, %29, %cst_28 {dimension_numbers = #tpu.dot_dimension_numbers<[1], [0], [0], [1], [0, 0, 1, 1], [], []>} : vector<8x16xbf16>, vector<16x8xbf16>, vector<8x8xf32> -> vector<8x8xf32>
    %c0_29 = arith.constant 0 : index
    %c0_30 = arith.constant 0 : index
    %46 = vector.load %arg17[%c0_29, %c0_30] : memref<8x64xf32, #tpu.memory_space<vmem>>, vector<8x8xf32>
    tpu.vector_store %arg17[%c0_29, %c0_30], %45 {strides = array<i32>} : memref<8x64xf32, #tpu.memory_space<vmem>>, vector<8x8xf32>,
    %cst_31 = arith.constant dense<0xFF800000> : vector<16xf32>
    %47 = vector.multi_reduction <maximumf>, %40, %cst_31 [0] : vector<8x16xf32> to vector<16xf32>
    %48 = vector.shape_cast %47 : vector<16xf32> to vector<1x16xf32>
    %49 = vector.shape_cast %48 : vector<1x16xf32> to vector<1x1x16xf32>
    %cst_32 = arith.constant dense<0.000000e+00> : vector<1xf32>
    %50 = vector.multi_reduction <add>, %49, %cst_32 [1, 2] : vector<1x1x16xf32> to vector<1xf32>
    %51 = vector.shape_cast %50 : vector<1xf32> to vector<1x1x1xf32>
    %52 = vector.extract %51[0, 0, 0] : f32 from vector<1x1x1xf32>
    %53 = vector.extract_strided_slice %14 {offsets = [0, 8], sizes = [8, 8], strides = [1, 1]} : vector<8x64xbf16> to vector<8x8xbf16>
    %54 = vector.extract_strided_slice %20 {offsets = [0, 8], sizes = [16, 8], strides = [1, 1]} : vector<16x64xbf16> to vector<16x8xbf16>
    %55 = vector.extract_strided_slice %26 {offsets = [0, 8], sizes = [16, 8], strides = [1, 1]} : vector<16x64xbf16> to vector<16x8xbf16>
    %cst_33 = arith.constant dense<0.000000e+00> : vector<8x16xf32>
    %56 = tpu.matmul %53, %54, %cst_33 {dimension_numbers = #tpu.dot_dimension_numbers<[1], [1], [0], [0], [0, 0, 1, 0], [], []>} : vector<8x8xbf16>, vector<16x8xbf16>, vector<8x16xf32> -> vector<8x16xf32>
    %cst_34 = arith.constant dense<0xFF800000> : vector<8xf32>
    %57 = vector.multi_reduction <maximumf>, %56, %cst_34 [1] : vector<8x16xf32> to vector<8xf32>
    %58 = vector.shape_cast %57 : vector<8xf32> to vector<8x1xf32>
    %59 = vector.broadcast %58 : vector<8x1xf32> to vector<8x16xf32>
    %60 = arith.subf %56, %59 : vector<8x16xf32>
    %61 = math.exp %60 : vector<8x16xf32>
    %cst_35 = arith.constant dense<0.000000e+00> : vector<8xf32>
    %62 = vector.multi_reduction <add>, %61, %cst_35 [1] : vector<8x16xf32> to vector<8xf32>
    %63 = vector.shape_cast %62 : vector<8xf32> to vector<8x1xf32>
    %64 = tpu.reciprocal %63 {approx = true} : vector<8x1xf32> -> vector<8x1xf32>
    %65 = vector.broadcast %64 : vector<8x1xf32> to vector<8x16xf32>
    %66 = arith.mulf %61, %65 : vector<8x16xf32>
    %c1 = arith.constant 1 : index
    %c0_36 = arith.constant 0 : index
    %c0_37 = arith.constant 0 : index
    %67 = vector.load %arg16[%c1, %c0_36, %c0_37] : memref<8x8x16xf32, #tpu.memory_space<vmem>>, vector<1x8x16xf32>
    %68 = vector.shape_cast %67 : vector<1x8x16xf32> to vector<8x16xf32>
    %69 = vector.shape_cast %66 : vector<8x16xf32> to vector<1x8x16xf32>
    tpu.vector_store %arg16[%c1, %c0_36, %c0_37], %69 {strides = array<i32>} : memref<8x8x16xf32, #tpu.memory_space<vmem>>, vector<1x8x16xf32>,
    %70 = arith.truncf %66 : vector<8x16xf32> to vector<8x16xbf16>
    %cst_38 = arith.constant dense<0.000000e+00> : vector<8x8xf32>
    %71 = tpu.matmul %70, %55, %cst_38 {dimension_numbers = #tpu.dot_dimension_numbers<[1], [0], [0], [1], [0, 0, 1, 1], [], []>} : vector<8x16xbf16>, vector<16x8xbf16>, vector<8x8xf32> -> vector<8x8xf32>
    %c0_39 = arith.constant 0 : index
    %c8 = arith.constant 8 : index
    %72 = vector.load %arg17[%c0_39, %c8] : memref<8x64xf32, #tpu.memory_space<vmem>>, vector<8x8xf32>
    tpu.vector_store %arg17[%c0_39, %c8], %71 {strides = array<i32>} : memref<8x64xf32, #tpu.memory_space<vmem>>, vector<8x8xf32>,
    %cst_40 = arith.constant dense<0xFF800000> : vector<16xf32>
    %73 = vector.multi_reduction <maximumf>, %66, %cst_40 [0] : vector<8x16xf32> to vector<16xf32>
    %74 = vector.shape_cast %73 : vector<16xf32> to vector<1x16xf32>
    %75 = vector.shape_cast %74 : vector<1x16xf32> to vector<1x1x16xf32>
    %cst_41 = arith.constant dense<0.000000e+00> : vector<1xf32>
    %76 = vector.multi_reduction <add>, %75, %cst_41 [1, 2] : vector<1x1x16xf32> to vector<1xf32>
    %77 = vector.shape_cast %76 : vector<1xf32> to vector<1x1x1xf32>
    %78 = vector.extract %77[0, 0, 0] : f32 from vector<1x1x1xf32>
    %79 = arith.cmpf ogt, %78, %52 : f32
    %80 = arith.select %79, %78, %52 : f32
    %c1_i32 = arith.constant 1 : i32
    %c0_i32 = arith.constant 0 : i32
    %81 = arith.select %79, %c1_i32, %c0_i32 : i32
    %82 = vector.extract_strided_slice %14 {offsets = [0, 16], sizes = [8, 8], strides = [1, 1]} : vector<8x64xbf16> to vector<8x8xbf16>
    %83 = vector.extract_strided_slice %20 {offsets = [0, 16], sizes = [16, 8], strides = [1, 1]} : vector<16x64xbf16> to vector<16x8xbf16>
    %84 = vector.extract_strided_slice %26 {offsets = [0, 16], sizes = [16, 8], strides = [1, 1]} : vector<16x64xbf16> to vector<16x8xbf16>
    %cst_42 = arith.constant dense<0.000000e+00> : vector<8x16xf32>
    %85 = tpu.matmul %82, %83, %cst_42 {dimension_numbers = #tpu.dot_dimension_numbers<[1], [1], [0], [0], [0, 0, 1, 0], [], []>} : vector<8x8xbf16>, vector<16x8xbf16>, vector<8x16xf32> -> vector<8x16xf32>
    %cst_43 = arith.constant dense<0xFF800000> : vector<8xf32>
    %86 = vector.multi_reduction <maximumf>, %85, %cst_43 [1] : vector<8x16xf32> to vector<8xf32>
    %87 = vector.shape_cast %86 : vector<8xf32> to vector<8x1xf32>
    %88 = vector.broadcast %87 : vector<8x1xf32> to vector<8x16xf32>
    %89 = arith.subf %85, %88 : vector<8x16xf32>
    %90 = math.exp %89 : vector<8x16xf32>
    %cst_44 = arith.constant dense<0.000000e+00> : vector<8xf32>
    %91 = vector.multi_reduction <add>, %90, %cst_44 [1] : vector<8x16xf32> to vector<8xf32>
    %92 = vector.shape_cast %91 : vector<8xf32> to vector<8x1xf32>
    %93 = tpu.reciprocal %92 {approx = true} : vector<8x1xf32> -> vector<8x1xf32>
    %94 = vector.broadcast %93 : vector<8x1xf32> to vector<8x16xf32>
    %95 = arith.mulf %90, %94 : vector<8x16xf32>
    %c2 = arith.constant 2 : index
    %c0_45 = arith.constant 0 : index
    %c0_46 = arith.constant 0 : index
    %96 = vector.load %arg16[%c2, %c0_45, %c0_46] : memref<8x8x16xf32, #tpu.memory_space<vmem>>, vector<1x8x16xf32>
    %97 = vector.shape_cast %96 : vector<1x8x16xf32> to vector<8x16xf32>
    %98 = vector.shape_cast %95 : vector<8x16xf32> to vector<1x8x16xf32>
    tpu.vector_store %arg16[%c2, %c0_45, %c0_46], %98 {strides = array<i32>} : memref<8x8x16xf32, #tpu.memory_space<vmem>>, vector<1x8x16xf32>,
    %99 = arith.truncf %95 : vector<8x16xf32> to vector<8x16xbf16>
    %cst_47 = arith.constant dense<0.000000e+00> : vector<8x8xf32>
    %100 = tpu.matmul %99, %84, %cst_47 {dimension_numbers = #tpu.dot_dimension_numbers<[1], [0], [0], [1], [0, 0, 1, 1], [], []>} : vector<8x16xbf16>, vector<16x8xbf16>, vector<8x8xf32> -> vector<8x8xf32>
    %c0_48 = arith.constant 0 : index
    %c16 = arith.constant 16 : index
    %101 = vector.load %arg17[%c0_48, %c16] : memref<8x64xf32, #tpu.memory_space<vmem>>, vector<8x8xf32>
    tpu.vector_store %arg17[%c0_48, %c16], %100 {strides = array<i32>} : memref<8x64xf32, #tpu.memory_space<vmem>>, vector<8x8xf32>,
    %cst_49 = arith.constant dense<0xFF800000> : vector<16xf32>
    %102 = vector.multi_reduction <maximumf>, %95, %cst_49 [0] : vector<8x16xf32> to vector<16xf32>
    %103 = vector.shape_cast %102 : vector<16xf32> to vector<1x16xf32>
    %104 = vector.shape_cast %103 : vector<1x16xf32> to vector<1x1x16xf32>
    %cst_50 = arith.constant dense<0.000000e+00> : vector<1xf32>
    %105 = vector.multi_reduction <add>, %104, %cst_50 [1, 2] : vector<1x1x16xf32> to vector<1xf32>
    %106 = vector.shape_cast %105 : vector<1xf32> to vector<1x1x1xf32>
    %107 = vector.extract %106[0, 0, 0] : f32 from vector<1x1x1xf32>
    %108 = arith.cmpf ogt, %107, %80 : f32
    %109 = arith.select %108, %107, %80 : f32
    %c2_i32 = arith.constant 2 : i32
    %110 = arith.select %108, %c2_i32, %81 : i32
    %111 = vector.extract_strided_slice %14 {offsets = [0, 24], sizes = [8, 8], strides = [1, 1]} : vector<8x64xbf16> to vector<8x8xbf16>
    %112 = vector.extract_strided_slice %20 {offsets = [0, 24], sizes = [16, 8], strides = [1, 1]} : vector<16x64xbf16> to vector<16x8xbf16>
    %113 = vector.extract_strided_slice %26 {offsets = [0, 24], sizes = [16, 8], strides = [1, 1]} : vector<16x64xbf16> to vector<16x8xbf16>
    %cst_51 = arith.constant dense<0.000000e+00> : vector<8x16xf32>
    %114 = tpu.matmul %111, %112, %cst_51 {dimension_numbers = #tpu.dot_dimension_numbers<[1], [1], [0], [0], [0, 0, 1, 0], [], []>} : vector<8x8xbf16>, vector<16x8xbf16>, vector<8x16xf32> -> vector<8x16xf32>
    %cst_52 = arith.constant dense<0xFF800000> : vector<8xf32>
    %115 = vector.multi_reduction <maximumf>, %114, %cst_52 [1] : vector<8x16xf32> to vector<8xf32>
    %116 = vector.shape_cast %115 : vector<8xf32> to vector<8x1xf32>
    %117 = vector.broadcast %116 : vector<8x1xf32> to vector<8x16xf32>
    %118 = arith.subf %114, %117 : vector<8x16xf32>
    %119 = math.exp %118 : vector<8x16xf32>
    %cst_53 = arith.constant dense<0.000000e+00> : vector<8xf32>
    %120 = vector.multi_reduction <add>, %119, %cst_53 [1] : vector<8x16xf32> to vector<8xf32>
    %121 = vector.shape_cast %120 : vector<8xf32> to vector<8x1xf32>
    %122 = tpu.reciprocal %121 {approx = true} : vector<8x1xf32> -> vector<8x1xf32>
    %123 = vector.broadcast %122 : vector<8x1xf32> to vector<8x16xf32>
    %124 = arith.mulf %119, %123 : vector<8x16xf32>
    %c3 = arith.constant 3 : index
    %c0_54 = arith.constant 0 : index
    %c0_55 = arith.constant 0 : index
    %125 = vector.load %arg16[%c3, %c0_54, %c0_55] : memref<8x8x16xf32, #tpu.memory_space<vmem>>, vector<1x8x16xf32>
    %126 = vector.shape_cast %125 : vector<1x8x16xf32> to vector<8x16xf32>
    %127 = vector.shape_cast %124 : vector<8x16xf32> to vector<1x8x16xf32>
    tpu.vector_store %arg16[%c3, %c0_54, %c0_55], %127 {strides = array<i32>} : memref<8x8x16xf32, #tpu.memory_space<vmem>>, vector<1x8x16xf32>,
    %128 = arith.truncf %124 : vector<8x16xf32> to vector<8x16xbf16>
    %cst_56 = arith.constant dense<0.000000e+00> : vector<8x8xf32>
    %129 = tpu.matmul %128, %113, %cst_56 {dimension_numbers = #tpu.dot_dimension_numbers<[1], [0], [0], [1], [0, 0, 1, 1], [], []>} : vector<8x16xbf16>, vector<16x8xbf16>, vector<8x8xf32> -> vector<8x8xf32>
    %c0_57 = arith.constant 0 : index
    %c24 = arith.constant 24 : index
    %130 = vector.load %arg17[%c0_57, %c24] : memref<8x64xf32, #tpu.memory_space<vmem>>, vector<8x8xf32>
    tpu.vector_store %arg17[%c0_57, %c24], %129 {strides = array<i32>} : memref<8x64xf32, #tpu.memory_space<vmem>>, vector<8x8xf32>,
    %cst_58 = arith.constant dense<0xFF800000> : vector<16xf32>
    %131 = vector.multi_reduction <maximumf>, %124, %cst_58 [0] : vector<8x16xf32> to vector<16xf32>
    %132 = vector.shape_cast %131 : vector<16xf32> to vector<1x16xf32>
    %133 = vector.shape_cast %132 : vector<1x16xf32> to vector<1x1x16xf32>
    %cst_59 = arith.constant dense<0.000000e+00> : vector<1xf32>
    %134 = vector.multi_reduction <add>, %133, %cst_59 [1, 2] : vector<1x1x16xf32> to vector<1xf32>
    %135 = vector.shape_cast %134 : vector<1xf32> to vector<1x1x1xf32>
    %136 = vector.extract %135[0, 0, 0] : f32 from vector<1x1x1xf32>
    %137 = arith.cmpf ogt, %136, %109 : f32
    %138 = arith.select %137, %136, %109 : f32
    %c3_i32 = arith.constant 3 : i32
    %139 = arith.select %137, %c3_i32, %110 : i32
    %140 = vector.extract_strided_slice %14 {offsets = [0, 32], sizes = [8, 8], strides = [1, 1]} : vector<8x64xbf16> to vector<8x8xbf16>
    %141 = vector.extract_strided_slice %20 {offsets = [0, 32], sizes = [16, 8], strides = [1, 1]} : vector<16x64xbf16> to vector<16x8xbf16>
    %142 = vector.extract_strided_slice %26 {offsets = [0, 32], sizes = [16, 8], strides = [1, 1]} : vector<16x64xbf16> to vector<16x8xbf16>
    %cst_60 = arith.constant dense<0.000000e+00> : vector<8x16xf32>
    %143 = tpu.matmul %140, %141, %cst_60 {dimension_numbers = #tpu.dot_dimension_numbers<[1], [1], [0], [0], [0, 0, 1, 0], [], []>} : vector<8x8xbf16>, vector<16x8xbf16>, vector<8x16xf32> -> vector<8x16xf32>
    %cst_61 = arith.constant dense<0xFF800000> : vector<8xf32>
    %144 = vector.multi_reduction <maximumf>, %143, %cst_61 [1] : vector<8x16xf32> to vector<8xf32>
    %145 = vector.shape_cast %144 : vector<8xf32> to vector<8x1xf32>
    %146 = vector.broadcast %145 : vector<8x1xf32> to vector<8x16xf32>
    %147 = arith.subf %143, %146 : vector<8x16xf32>
    %148 = math.exp %147 : vector<8x16xf32>
    %cst_62 = arith.constant dense<0.000000e+00> : vector<8xf32>
    %149 = vector.multi_reduction <add>, %148, %cst_62 [1] : vector<8x16xf32> to vector<8xf32>
    %150 = vector.shape_cast %149 : vector<8xf32> to vector<8x1xf32>
    %151 = tpu.reciprocal %150 {approx = true} : vector<8x1xf32> -> vector<8x1xf32>
    %152 = vector.broadcast %151 : vector<8x1xf32> to vector<8x16xf32>
    %153 = arith.mulf %148, %152 : vector<8x16xf32>
    %c4 = arith.constant 4 : index
    %c0_63 = arith.constant 0 : index
    %c0_64 = arith.constant 0 : index
    %154 = vector.load %arg16[%c4, %c0_63, %c0_64] : memref<8x8x16xf32, #tpu.memory_space<vmem>>, vector<1x8x16xf32>
    %155 = vector.shape_cast %154 : vector<1x8x16xf32> to vector<8x16xf32>
    %156 = vector.shape_cast %153 : vector<8x16xf32> to vector<1x8x16xf32>
    tpu.vector_store %arg16[%c4, %c0_63, %c0_64], %156 {strides = array<i32>} : memref<8x8x16xf32, #tpu.memory_space<vmem>>, vector<1x8x16xf32>,
    %157 = arith.truncf %153 : vector<8x16xf32> to vector<8x16xbf16>
    %cst_65 = arith.constant dense<0.000000e+00> : vector<8x8xf32>
    %158 = tpu.matmul %157, %142, %cst_65 {dimension_numbers = #tpu.dot_dimension_numbers<[1], [0], [0], [1], [0, 0, 1, 1], [], []>} : vector<8x16xbf16>, vector<16x8xbf16>, vector<8x8xf32> -> vector<8x8xf32>
    %c0_66 = arith.constant 0 : index
    %c32 = arith.constant 32 : index
    %159 = vector.load %arg17[%c0_66, %c32] : memref<8x64xf32, #tpu.memory_space<vmem>>, vector<8x8xf32>
    tpu.vector_store %arg17[%c0_66, %c32], %158 {strides = array<i32>} : memref<8x64xf32, #tpu.memory_space<vmem>>, vector<8x8xf32>,
    %cst_67 = arith.constant dense<0xFF800000> : vector<16xf32>
    %160 = vector.multi_reduction <maximumf>, %153, %cst_67 [0] : vector<8x16xf32> to vector<16xf32>
    %161 = vector.shape_cast %160 : vector<16xf32> to vector<1x16xf32>
    %162 = vector.shape_cast %161 : vector<1x16xf32> to vector<1x1x16xf32>
    %cst_68 = arith.constant dense<0.000000e+00> : vector<1xf32>
    %163 = vector.multi_reduction <add>, %162, %cst_68 [1, 2] : vector<1x1x16xf32> to vector<1xf32>
    %164 = vector.shape_cast %163 : vector<1xf32> to vector<1x1x1xf32>
    %165 = vector.extract %164[0, 0, 0] : f32 from vector<1x1x1xf32>
    %166 = arith.cmpf ogt, %165, %138 : f32
    %167 = arith.select %166, %165, %138 : f32
    %c4_i32 = arith.constant 4 : i32
    %168 = arith.select %166, %c4_i32, %139 : i32
    %169 = vector.extract_strided_slice %14 {offsets = [0, 40], sizes = [8, 8], strides = [1, 1]} : vector<8x64xbf16> to vector<8x8xbf16>
    %170 = vector.extract_strided_slice %20 {offsets = [0, 40], sizes = [16, 8], strides = [1, 1]} : vector<16x64xbf16> to vector<16x8xbf16>
    %171 = vector.extract_strided_slice %26 {offsets = [0, 40], sizes = [16, 8], strides = [1, 1]} : vector<16x64xbf16> to vector<16x8xbf16>
    %cst_69 = arith.constant dense<0.000000e+00> : vector<8x16xf32>
    %172 = tpu.matmul %169, %170, %cst_69 {dimension_numbers = #tpu.dot_dimension_numbers<[1], [1], [0], [0], [0, 0, 1, 0], [], []>} : vector<8x8xbf16>, vector<16x8xbf16>, vector<8x16xf32> -> vector<8x16xf32>
    %cst_70 = arith.constant dense<0xFF800000> : vector<8xf32>
    %173 = vector.multi_reduction <maximumf>, %172, %cst_70 [1] : vector<8x16xf32> to vector<8xf32>
    %174 = vector.shape_cast %173 : vector<8xf32> to vector<8x1xf32>
    %175 = vector.broadcast %174 : vector<8x1xf32> to vector<8x16xf32>
    %176 = arith.subf %172, %175 : vector<8x16xf32>
    %177 = math.exp %176 : vector<8x16xf32>
    %cst_71 = arith.constant dense<0.000000e+00> : vector<8xf32>
    %178 = vector.multi_reduction <add>, %177, %cst_71 [1] : vector<8x16xf32> to vector<8xf32>
    %179 = vector.shape_cast %178 : vector<8xf32> to vector<8x1xf32>
    %180 = tpu.reciprocal %179 {approx = true} : vector<8x1xf32> -> vector<8x1xf32>
    %181 = vector.broadcast %180 : vector<8x1xf32> to vector<8x16xf32>
    %182 = arith.mulf %177, %181 : vector<8x16xf32>
    %c5 = arith.constant 5 : index
    %c0_72 = arith.constant 0 : index
    %c0_73 = arith.constant 0 : index
    %183 = vector.load %arg16[%c5, %c0_72, %c0_73] : memref<8x8x16xf32, #tpu.memory_space<vmem>>, vector<1x8x16xf32>
    %184 = vector.shape_cast %183 : vector<1x8x16xf32> to vector<8x16xf32>
    %185 = vector.shape_cast %182 : vector<8x16xf32> to vector<1x8x16xf32>
    tpu.vector_store %arg16[%c5, %c0_72, %c0_73], %185 {strides = array<i32>} : memref<8x8x16xf32, #tpu.memory_space<vmem>>, vector<1x8x16xf32>,
    %186 = arith.truncf %182 : vector<8x16xf32> to vector<8x16xbf16>
    %cst_74 = arith.constant dense<0.000000e+00> : vector<8x8xf32>
    %187 = tpu.matmul %186, %171, %cst_74 {dimension_numbers = #tpu.dot_dimension_numbers<[1], [0], [0], [1], [0, 0, 1, 1], [], []>} : vector<8x16xbf16>, vector<16x8xbf16>, vector<8x8xf32> -> vector<8x8xf32>
    %c0_75 = arith.constant 0 : index
    %c40 = arith.constant 40 : index
    %188 = vector.load %arg17[%c0_75, %c40] : memref<8x64xf32, #tpu.memory_space<vmem>>, vector<8x8xf32>
    tpu.vector_store %arg17[%c0_75, %c40], %187 {strides = array<i32>} : memref<8x64xf32, #tpu.memory_space<vmem>>, vector<8x8xf32>,
    %cst_76 = arith.constant dense<0xFF800000> : vector<16xf32>
    %189 = vector.multi_reduction <maximumf>, %182, %cst_76 [0] : vector<8x16xf32> to vector<16xf32>
    %190 = vector.shape_cast %189 : vector<16xf32> to vector<1x16xf32>
    %191 = vector.shape_cast %190 : vector<1x16xf32> to vector<1x1x16xf32>
    %cst_77 = arith.constant dense<0.000000e+00> : vector<1xf32>
    %192 = vector.multi_reduction <add>, %191, %cst_77 [1, 2] : vector<1x1x16xf32> to vector<1xf32>
    %193 = vector.shape_cast %192 : vector<1xf32> to vector<1x1x1xf32>
    %194 = vector.extract %193[0, 0, 0] : f32 from vector<1x1x1xf32>
    %195 = arith.cmpf ogt, %194, %167 : f32
    %196 = arith.select %195, %194, %167 : f32
    %c5_i32 = arith.constant 5 : i32
    %197 = arith.select %195, %c5_i32, %168 : i32
    %198 = vector.extract_strided_slice %14 {offsets = [0, 48], sizes = [8, 8], strides = [1, 1]} : vector<8x64xbf16> to vector<8x8xbf16>
    %199 = vector.extract_strided_slice %20 {offsets = [0, 48], sizes = [16, 8], strides = [1, 1]} : vector<16x64xbf16> to vector<16x8xbf16>
    %200 = vector.extract_strided_slice %26 {offsets = [0, 48], sizes = [16, 8], strides = [1, 1]} : vector<16x64xbf16> to vector<16x8xbf16>
    %cst_78 = arith.constant dense<0.000000e+00> : vector<8x16xf32>
    %201 = tpu.matmul %198, %199, %cst_78 {dimension_numbers = #tpu.dot_dimension_numbers<[1], [1], [0], [0], [0, 0, 1, 0], [], []>} : vector<8x8xbf16>, vector<16x8xbf16>, vector<8x16xf32> -> vector<8x16xf32>
    %cst_79 = arith.constant dense<0xFF800000> : vector<8xf32>
    %202 = vector.multi_reduction <maximumf>, %201, %cst_79 [1] : vector<8x16xf32> to vector<8xf32>
    %203 = vector.shape_cast %202 : vector<8xf32> to vector<8x1xf32>
    %204 = vector.broadcast %203 : vector<8x1xf32> to vector<8x16xf32>
    %205 = arith.subf %201, %204 : vector<8x16xf32>
    %206 = math.exp %205 : vector<8x16xf32>
    %cst_80 = arith.constant dense<0.000000e+00> : vector<8xf32>
    %207 = vector.multi_reduction <add>, %206, %cst_80 [1] : vector<8x16xf32> to vector<8xf32>
    %208 = vector.shape_cast %207 : vector<8xf32> to vector<8x1xf32>
    %209 = tpu.reciprocal %208 {approx = true} : vector<8x1xf32> -> vector<8x1xf32>
    %210 = vector.broadcast %209 : vector<8x1xf32> to vector<8x16xf32>
    %211 = arith.mulf %206, %210 : vector<8x16xf32>
    %c6 = arith.constant 6 : index
    %c0_81 = arith.constant 0 : index
    %c0_82 = arith.constant 0 : index
    %212 = vector.load %arg16[%c6, %c0_81, %c0_82] : memref<8x8x16xf32, #tpu.memory_space<vmem>>, vector<1x8x16xf32>
    %213 = vector.shape_cast %212 : vector<1x8x16xf32> to vector<8x16xf32>
    %214 = vector.shape_cast %211 : vector<8x16xf32> to vector<1x8x16xf32>
    tpu.vector_store %arg16[%c6, %c0_81, %c0_82], %214 {strides = array<i32>} : memref<8x8x16xf32, #tpu.memory_space<vmem>>, vector<1x8x16xf32>,
    %215 = arith.truncf %211 : vector<8x16xf32> to vector<8x16xbf16>
    %cst_83 = arith.constant dense<0.000000e+00> : vector<8x8xf32>
    %216 = tpu.matmul %215, %200, %cst_83 {dimension_numbers = #tpu.dot_dimension_numbers<[1], [0], [0], [1], [0, 0, 1, 1], [], []>} : vector<8x16xbf16>, vector<16x8xbf16>, vector<8x8xf32> -> vector<8x8xf32>
    %c0_84 = arith.constant 0 : index
    %c48 = arith.constant 48 : index
    %217 = vector.load %arg17[%c0_84, %c48] : memref<8x64xf32, #tpu.memory_space<vmem>>, vector<8x8xf32>
    tpu.vector_store %arg17[%c0_84, %c48], %216 {strides = array<i32>} : memref<8x64xf32, #tpu.memory_space<vmem>>, vector<8x8xf32>,
    %cst_85 = arith.constant dense<0xFF800000> : vector<16xf32>
    %218 = vector.multi_reduction <maximumf>, %211, %cst_85 [0] : vector<8x16xf32> to vector<16xf32>
    %219 = vector.shape_cast %218 : vector<16xf32> to vector<1x16xf32>
    %220 = vector.shape_cast %219 : vector<1x16xf32> to vector<1x1x16xf32>
    %cst_86 = arith.constant dense<0.000000e+00> : vector<1xf32>
    %221 = vector.multi_reduction <add>, %220, %cst_86 [1, 2] : vector<1x1x16xf32> to vector<1xf32>
    %222 = vector.shape_cast %221 : vector<1xf32> to vector<1x1x1xf32>
    %223 = vector.extract %222[0, 0, 0] : f32 from vector<1x1x1xf32>
    %224 = arith.cmpf ogt, %223, %196 : f32
    %225 = arith.select %224, %223, %196 : f32
    %c6_i32 = arith.constant 6 : i32
    %226 = arith.select %224, %c6_i32, %197 : i32
    %227 = vector.extract_strided_slice %14 {offsets = [0, 56], sizes = [8, 8], strides = [1, 1]} : vector<8x64xbf16> to vector<8x8xbf16>
    %228 = vector.extract_strided_slice %20 {offsets = [0, 56], sizes = [16, 8], strides = [1, 1]} : vector<16x64xbf16> to vector<16x8xbf16>
    %229 = vector.extract_strided_slice %26 {offsets = [0, 56], sizes = [16, 8], strides = [1, 1]} : vector<16x64xbf16> to vector<16x8xbf16>
    %cst_87 = arith.constant dense<0.000000e+00> : vector<8x16xf32>
    %230 = tpu.matmul %227, %228, %cst_87 {dimension_numbers = #tpu.dot_dimension_numbers<[1], [1], [0], [0], [0, 0, 1, 0], [], []>} : vector<8x8xbf16>, vector<16x8xbf16>, vector<8x16xf32> -> vector<8x16xf32>
    %cst_88 = arith.constant dense<0xFF800000> : vector<8xf32>
    %231 = vector.multi_reduction <maximumf>, %230, %cst_88 [1] : vector<8x16xf32> to vector<8xf32>
    %232 = vector.shape_cast %231 : vector<8xf32> to vector<8x1xf32>
    %233 = vector.broadcast %232 : vector<8x1xf32> to vector<8x16xf32>
    %234 = arith.subf %230, %233 : vector<8x16xf32>
    %235 = math.exp %234 : vector<8x16xf32>
    %cst_89 = arith.constant dense<0.000000e+00> : vector<8xf32>
    %236 = vector.multi_reduction <add>, %235, %cst_89 [1] : vector<8x16xf32> to vector<8xf32>
    %237 = vector.shape_cast %236 : vector<8xf32> to vector<8x1xf32>
    %238 = tpu.reciprocal %237 {approx = true} : vector<8x1xf32> -> vector<8x1xf32>
    %239 = vector.broadcast %238 : vector<8x1xf32> to vector<8x16xf32>
    %240 = arith.mulf %235, %239 : vector<8x16xf32>
    %c7 = arith.constant 7 : index
    %c0_90 = arith.constant 0 : index
    %c0_91 = arith.constant 0 : index
    %241 = vector.load %arg16[%c7, %c0_90, %c0_91] : memref<8x8x16xf32, #tpu.memory_space<vmem>>, vector<1x8x16xf32>
    %242 = vector.shape_cast %241 : vector<1x8x16xf32> to vector<8x16xf32>
    %243 = vector.shape_cast %240 : vector<8x16xf32> to vector<1x8x16xf32>
    tpu.vector_store %arg16[%c7, %c0_90, %c0_91], %243 {strides = array<i32>} : memref<8x8x16xf32, #tpu.memory_space<vmem>>, vector<1x8x16xf32>,
    %244 = arith.truncf %240 : vector<8x16xf32> to vector<8x16xbf16>
    %cst_92 = arith.constant dense<0.000000e+00> : vector<8x8xf32>
    %245 = tpu.matmul %244, %229, %cst_92 {dimension_numbers = #tpu.dot_dimension_numbers<[1], [0], [0], [1], [0, 0, 1, 1], [], []>} : vector<8x16xbf16>, vector<16x8xbf16>, vector<8x8xf32> -> vector<8x8xf32>
    %c0_93 = arith.constant 0 : index
    %c56 = arith.constant 56 : index
    %246 = vector.load %arg17[%c0_93, %c56] : memref<8x64xf32, #tpu.memory_space<vmem>>, vector<8x8xf32>
    tpu.vector_store %arg17[%c0_93, %c56], %245 {strides = array<i32>} : memref<8x64xf32, #tpu.memory_space<vmem>>, vector<8x8xf32>,
    %cst_94 = arith.constant dense<0xFF800000> : vector<16xf32>
    %247 = vector.multi_reduction <maximumf>, %240, %cst_94 [0] : vector<8x16xf32> to vector<16xf32>
    %248 = vector.shape_cast %247 : vector<16xf32> to vector<1x16xf32>
    %249 = vector.shape_cast %248 : vector<1x16xf32> to vector<1x1x16xf32>
    %cst_95 = arith.constant dense<0.000000e+00> : vector<1xf32>
    %250 = vector.multi_reduction <add>, %249, %cst_95 [1, 2] : vector<1x1x16xf32> to vector<1xf32>
    %251 = vector.shape_cast %250 : vector<1xf32> to vector<1x1x1xf32>
    %252 = vector.extract %251[0, 0, 0] : f32 from vector<1x1x1xf32>
    %253 = arith.cmpf ogt, %252, %225 : f32
    %c7_i32 = arith.constant 7 : i32
    %254 = arith.select %253, %c7_i32, %226 : i32
    %255 = arith.index_cast %254 : i32 to index
    %c0_96 = arith.constant 0 : index
    %c0_97 = arith.constant 0 : index
    %256 = vector.load %arg16[%255, %c0_96, %c0_97] : memref<8x8x16xf32, #tpu.memory_space<vmem>>, vector<1x8x16xf32>
    %257 = vector.shape_cast %256 : vector<1x8x16xf32> to vector<8x16xf32>
    %c0_98 = arith.constant 0 : index
    %c0_99 = arith.constant 0 : index
    %c0_100 = arith.constant 0 : index
    %258 = vector.load %arg15[%c0_98, %c0_99, %c0_100] : memref<1x8x16xf32, #tpu.memory_space<vmem>>, vector<1x8x16xf32>
    %259 = vector.shape_cast %258 : vector<1x8x16xf32> to vector<8x16xf32>
    %260 = vector.shape_cast %257 : vector<8x16xf32> to vector<1x8x16xf32>
    tpu.vector_store %arg15[%c0_98, %c0_99, %c0_100], %260 {strides = array<i32>} : memref<1x8x16xf32, #tpu.memory_space<vmem>>, vector<1x8x16xf32>,
    %c0_101 = arith.constant 0 : index
    %c0_102 = arith.constant 0 : index
    %261 = vector.load %arg17[%c0_101, %c0_102] : memref<8x64xf32, #tpu.memory_space<vmem>>, vector<8x64xf32>
    %262 = arith.truncf %261 : vector<8x64xf32> to vector<8x64xbf16>
    %c0_103 = arith.constant 0 : index
    %c0_104 = arith.constant 0 : index
    %263 = vector.load %arg10[%c0_103, %c0_104] : memref<64x32xbf16, #tpu.memory_space<vmem>>, vector<64x32xbf16>
    %cst_105 = arith.constant dense<0.000000e+00> : vector<8x32xf32>
    %264 = tpu.matmul %262, %263, %cst_105 {dimension_numbers = #tpu.dot_dimension_numbers<[1], [0], [0], [1], [0, 0, 1, 1], [], []>} : vector<8x64xbf16>, vector<64x32xbf16>, vector<8x32xf32> -> vector<8x32xf32>
    %c0_106 = arith.constant 0 : index
    %c0_107 = arith.constant 0 : index
    %265 = vector.load %arg11[%c0_106, %c0_107] : memref<1x32xf32, #tpu.memory_space<vmem>>, vector<1x32xf32>
    %266 = vector.broadcast %265 : vector<1x32xf32> to vector<8x32xf32>
    %267 = arith.addf %264, %266 : vector<8x32xf32>
    %cst_108 = arith.constant dense<0.000000e+00> : vector<8xf32>
    %268 = vector.multi_reduction <add>, %267, %cst_108 [1] : vector<8x32xf32> to vector<8xf32>
    %269 = vector.shape_cast %268 : vector<8xf32> to vector<8x1xf32>
    %cst_109 = arith.constant 3.200000e+01 : f32
    %270 = vector.broadcast %cst_109 : f32 to vector<8x1xf32>
    %271 = arith.divf %269, %270 : vector<8x1xf32>
    %272 = vector.broadcast %271 : vector<8x1xf32> to vector<8x32xf32>
    %273 = arith.subf %267, %272 : vector<8x32xf32>
    %274 = arith.mulf %273, %273 : vector<8x32xf32>
    %cst_110 = arith.constant dense<0.000000e+00> : vector<8xf32>
    %275 = vector.multi_reduction <add>, %274, %cst_110 [1] : vector<8x32xf32> to vector<8xf32>
    %276 = vector.shape_cast %275 : vector<8xf32> to vector<8x1xf32>
    %cst_111 = arith.constant 3.200000e+01 : f32
    %277 = vector.broadcast %cst_111 : f32 to vector<8x1xf32>
    %278 = arith.divf %276, %277 : vector<8x1xf32>
    %279 = vector.broadcast %271 : vector<8x1xf32> to vector<8x32xf32>
    %280 = arith.subf %267, %279 : vector<8x32xf32>
    %cst_112 = arith.constant 9.99999974E-6 : f32
    %281 = vector.broadcast %cst_112 : f32 to vector<8x1xf32>
    %282 = arith.addf %278, %281 : vector<8x1xf32>
    %283 = math.rsqrt %282 : vector<8x1xf32>
    %284 = vector.broadcast %283 : vector<8x1xf32> to vector<8x32xf32>
    %285 = arith.mulf %280, %284 : vector<8x32xf32>
    %c0_113 = arith.constant 0 : index
    %c0_114 = arith.constant 0 : index
    %286 = vector.load %arg12[%c0_113, %c0_114] : memref<1x32xf32, #tpu.memory_space<vmem>>, vector<1x32xf32>
    %287 = vector.broadcast %286 : vector<1x32xf32> to vector<8x32xf32>
    %288 = arith.mulf %285, %287 : vector<8x32xf32>
    %c0_115 = arith.constant 0 : index
    %c0_116 = arith.constant 0 : index
    %289 = vector.load %arg13[%c0_115, %c0_116] : memref<1x32xf32, #tpu.memory_space<vmem>>, vector<1x32xf32>
    %290 = vector.broadcast %289 : vector<1x32xf32> to vector<8x32xf32>
    %291 = arith.addf %288, %290 : vector<8x32xf32>
    %c0_117 = arith.constant 0 : index
    %c0_118 = arith.constant 0 : index
    %c0_119 = arith.constant 0 : index
    %292 = vector.load %arg14[%c0_117, %c0_118, %c0_119] : memref<1x8x32xf32, #tpu.memory_space<vmem>>, vector<1x8x32xf32>
    %293 = vector.shape_cast %292 : vector<1x8x32xf32> to vector<8x32xf32>
    %294 = vector.shape_cast %291 : vector<8x32xf32> to vector<1x8x32xf32>
    tpu.vector_store %arg14[%c0_117, %c0_118, %c0_119], %294 {strides = array<i32>} : memref<1x8x32xf32, #tpu.memory_space<vmem>>, vector<1x8x32xf32>,
    return
  }
  func.func @transform_0(%arg0: i32) -> (i32, i32, i32) {
    %c0_i32 = arith.constant 0 : i32
    %c0_i32_0 = arith.constant 0 : i32
    %c0_i32_1 = arith.constant 0 : i32
    return %arg0, %c0_i32, %c0_i32_0 : i32, i32, i32
  }
  func.func @transform_1(%arg0: i32) -> (i32, i32, i32) {
    %c0_i32 = arith.constant 0 : i32
    %c0_i32_0 = arith.constant 0 : i32
    %c0_i32_1 = arith.constant 0 : i32
    return %arg0, %c0_i32, %c0_i32_0 : i32, i32, i32
  }
  func.func @transform_2(%arg0: i32) -> (i32, i32, i32) {
    %c0_i32 = arith.constant 0 : i32
    %c0_i32_0 = arith.constant 0 : i32
    %c0_i32_1 = arith.constant 0 : i32
    return %arg0, %c0_i32, %c0_i32_0 : i32, i32, i32
  }
  func.func @transform_3(%arg0: i32) -> (i32, i32) {
    %c0_i32 = arith.constant 0 : i32
    %c0_i32_0 = arith.constant 0 : i32
    %c0_i32_1 = arith.constant 0 : i32
    return %c0_i32, %c0_i32_0 : i32, i32
  }
  func.func @transform_4(%arg0: i32) -> (i32, i32) {
    %c0_i32 = arith.constant 0 : i32
    %c0_i32_0 = arith.constant 0 : i32
    %c0_i32_1 = arith.constant 0 : i32
    return %c0_i32, %c0_i32_0 : i32, i32
  }
  func.func @transform_5(%arg0: i32) -> (i32, i32) {
    %c0_i32 = arith.constant 0 : i32
    %c0_i32_0 = arith.constant 0 : i32
    %c0_i32_1 = arith.constant 0 : i32
    return %c0_i32, %c0_i32_0 : i32, i32
  }
  func.func @transform_6(%arg0: i32) -> (i32, i32) {
    %c0_i32 = arith.constant 0 : i32
    %c0_i32_0 = arith.constant 0 : i32
    %c0_i32_1 = arith.constant 0 : i32
    return %c0_i32, %c0_i32_0 : i32, i32
  }
  func.func @transform_7(%arg0: i32) -> (i32, i32) {
    %c0_i32 = arith.constant 0 : i32
    %c0_i32_0 = arith.constant 0 : i32
    %c0_i32_1 = arith.constant 0 : i32
    return %c0_i32, %c0_i32_0 : i32, i32
  }
  func.func @transform_8(%arg0: i32) -> (i32, i32) {
    %c0_i32 = arith.constant 0 : i32
    %c0_i32_0 = arith.constant 0 : i32
    %c0_i32_1 = arith.constant 0 : i32
    return %c0_i32, %c0_i32_0 : i32, i32
  }
  func.func @transform_9(%arg0: i32) -> (i32, i32) {
    %c0_i32 = arith.constant 0 : i32
    %c0_i32_0 = arith.constant 0 : i32
    %c0_i32_1 = arith.constant 0 : i32
    return %c0_i32, %c0_i32_0 : i32, i32
  }
  func.func @transform_10(%arg0: i32) -> (i32, i32) {
    %c0_i32 = arith.constant 0 : i32
    %c0_i32_0 = arith.constant 0 : i32
    %c0_i32_1 = arith.constant 0 : i32
    return %c0_i32, %c0_i32_0 : i32, i32
  }
  func.func @transform_11(%arg0: i32) -> (i32, i32) {
    %c0_i32 = arith.constant 0 : i32
    %c0_i32_0 = arith.constant 0 : i32
    %c0_i32_1 = arith.constant 0 : i32
    return %c0_i32, %c0_i32_0 : i32, i32
  }
  func.func @transform_12(%arg0: i32) -> (i32, i32) {
    %c0_i32 = arith.constant 0 : i32
    %c0_i32_0 = arith.constant 0 : i32
    %c0_i32_1 = arith.constant 0 : i32
    return %c0_i32, %c0_i32_0 : i32, i32
  }
  func.func @transform_13(%arg0: i32) -> (i32, i32, i32) {
    %c0_i32 = arith.constant 0 : i32
    %c0_i32_0 = arith.constant 0 : i32
    %c0_i32_1 = arith.constant 0 : i32
    return %arg0, %c0_i32, %c0_i32_0 : i32, i32, i32
  }
  func.func @transform_14(%arg0: i32) -> (i32, i32, i32) {
    %c0_i32 = arith.constant 0 : i32
    %c0_i32_0 = arith.constant 0 : i32
    %c0_i32_1 = arith.constant 0 : i32
    return %arg0, %c0_i32, %c0_i32_0 : i32, i32, i32
  }
}

</mosaic_0001>

<llo_original>
// kernel: smma_forward.1
$region0: #{smma_forward.1}
  #allocation0 [shape = 'u32[]', space=smem, size = 0x4, offset = 0x4, fixed_abs, tag = 'smem constant byte address 0x4 - core index']
  #allocation1 [shape = 'u32[72,128]{1,0:T(1,128)}', space=vmem, size = 0x9000, scoped, tag = 'internal scratch']
  #allocation2 [shape = 'f32[8,8,16]{2,1,0:T(8,128)}', space=vmem, size = 0x8000, scoped, tag = 'scratch operand']
  #allocation3 [shape = 'f32[8,64]{1,0:T(8,128)}', space=vmem, size = 0x1000, scoped, tag = 'scratch operand']
  %s0 = inlined_call_operand.vmem [shape: f32[2,8,32], index: 0, kind: input, shape index: {}]
  %s1 = inlined_call_operand.vmem [shape: f32[2,16,32], index: 1, kind: input, shape index: {}]
  %s2 = inlined_call_operand.hbm [shape: f32[2,16,32], index: 2, kind: input, shape index: {}]
  %s3 = inlined_call_operand.hbm [shape: bf16[32,64], index: 3, kind: input, shape index: {}]
  %s4 = inlined_call_operand.vmem [shape: f32[1,64], index: 4, kind: input, shape index: {}]
  %s5 = inlined_call_operand.hbm [shape: bf16[32,64], index: 5, kind: input, shape index: {}]
  %s6 = inlined_call_operand.vmem [shape: f32[1,64], index: 6, kind: input, shape index: {}]
  %s7 = inlined_call_operand.hbm [shape: bf16[32,64], index: 7, kind: input, shape index: {}]
  %s8 = inlined_call_operand.vmem [shape: f32[1,64], index: 8, kind: input, shape index: {}]
  %s9 = inlined_call_operand.vmem [shape: bf16[64,32], index: 9, kind: input, shape index: {}]
  %s10 = inlined_call_operand.vmem [shape: f32[1,32], index: 10, kind: input, shape index: {}]
  %s11 = inlined_call_operand.vmem [shape: f32[1,32], index: 11, kind: input, shape index: {}]
  %s12 = inlined_call_operand.vmem [shape: f32[1,32], index: 12, kind: input, shape index: {}]
  %s13 = inlined_call_operand.hbm [shape: f32[2,8,32], index: 13, kind: output, shape index: {0}]
  %s14 = inlined_call_operand.vmem [shape: f32[2,8,16], index: 14, kind: output, shape index: {1}]
  %15 = xla_tuple %s13, %s14
  %s16 = sld [smem:[#allocation0]]
  $region109: #{smma_forward.1} parent=0
    _
  %s18 = ssub.s32 1, %s16
  %s19 = scalar_select 0, %s18, %s16
  $region1: #{smma_forward.1} parent=0
    #allocation4 [shape = 'u8[16384]{0}', space=vmem, size = 0x4000, scoped, tag = 'input window, operand 2']
    #allocation5 [shape = 's32[2]{0}', space=sflag, size = 0x8, scoped, tag = 'scoped memory for smma_forward.1']
    #allocation6 [shape = 's32[2]{0}', space=sflag, size = 0x8, scoped, tag = 'scoped memory for smma_forward.1']
    #allocation7 [shape = 'u8[8192]{0}', space=vmem, size = 0x2000, scoped, tag = 'input window, operand 3, single buffered']
    #allocation8 [shape = 's32[1]{0}', space=sflag, size = 0x4, scoped, tag = 'scoped memory for smma_forward.1']
    #allocation9 [shape = 'u8[8192]{0}', space=vmem, size = 0x2000, scoped, tag = 'input window, operand 5, single buffered']
    #allocation10 [shape = 'u8[8192]{0}', space=vmem, size = 0x2000, scoped, tag = 'input window, operand 7, single buffered']
    #allocation11 [shape = 's32[1]{0}', space=sflag, size = 0x4, scoped, tag = 'scoped memory for smma_forward.1']
    #allocation12 [shape = 'u8[8192]{0}', space=vmem, size = 0x2000, scoped, tag = 'output window, operand 0']
    %20 = vsyncpa [#allocation5], 0
    %s21 = scalar_lea.sflag [#allocation5], 1
    %22 = vsyncpa %s21, 0
    %23 = vsyncpa [#allocation8], 0
    %24 = vsyncpa [#allocation11], 0
    %25 = vsyncpa [#allocation6], 0
    %s26 = scalar_lea.sflag [#allocation6], 1
    %27 = vsyncpa %s26, 0
    loop: start=0, step=1, limit=4
    $region2: #{smma_forward.1} parent=1 // loop_pre_header
      _
    $region3: #{smma_forward.1} parent=1 // loop_header
      %s29 = sphi 0, %s33
      %p30 = scmp.ge.s32.totalorder %s29, 4
      %s39 = sphi 0, %s41
      %s42 = sphi 0, %s39
      %s43 = sphi 0, %s42
      %s59 = sphi 0, %s43
      %s65 = sphi 0, %s67
      %s68 = sphi 0, %s65
      %s69 = sphi 0, %s68
      %s85 = sphi 0, %s69
      %s91 = sphi 0, %s93
      %s94 = sphi 0, %s91
      %s95 = sphi 0, %s94
      %s111 = sphi 0, %s95
      %s115 = sphi 0, %s115
      %s117 = sphi 0, %s115
      %s118 = sphi 0, %s117
      %s132 = sphi 0, %s118
      %s136 = sphi 0, %s136
      %s138 = sphi 0, %s136
      %s139 = sphi 0, %s138
      %s153 = sphi 0, %s139
      %s157 = sphi 0, %s157
      %s159 = sphi 0, %s157
      %s160 = sphi 0, %s159
      %s174 = sphi 0, %s160
      %s178 = sphi 0, %s178
      %s180 = sphi 0, %s178
      %s181 = sphi 0, %s180
      %s195 = sphi 0, %s181
      %s199 = sphi 0, %s199
      %s201 = sphi 0, %s199
      %s202 = sphi 0, %s201
      %s216 = sphi 0, %s202
      %s220 = sphi 0, %s220
      %s222 = sphi 0, %s220
      %s223 = sphi 0, %s222
      %s237 = sphi 0, %s223
      %s241 = sphi 0, %s241
      %s243 = sphi 0, %s241
      %s244 = sphi 0, %s243
      %s258 = sphi 0, %s244
      %s262 = sphi 0, %s262
      %s264 = sphi 0, %s262
      %s265 = sphi 0, %s264
      %s279 = sphi 0, %s265
      %s283 = sphi 0, %s283
      %s285 = sphi 0, %s283
      %s286 = sphi 0, %s285
      %s300 = sphi 0, %s286
      %s304 = sphi 0, %s304
      %s306 = sphi 0, %s304
      %s307 = sphi 0, %s306
      %s321 = sphi 0, %s307
      %s327 = sphi 0, %s329
      %s330 = sphi 0, %s327
      %s331 = sphi 0, %s330
      %s347 = sphi 0, %s331
      %s353 = sphi 0, %s355
      %s356 = sphi 0, %s353
      %s357 = sphi 0, %s356
      %s373 = sphi 0, %s357
    $region4: #{smma_forward.1} parent=1 // loop_header_branch
      %32 = sbr.rel (%p30) target = $region8
    $region5: #{smma_forward.1} parent=1 // loop_body
      %s34 = ssub.s32 %s29, 1
      %s35 = ssub.s32 %s29, 2
      %s36 = sadd.s32 %s29, 1
      %s37 = ssub.s32 %s29, %s36
      %p38 = scmp.eq.s32.totalorder %s37, 0
      %s40 = sadd.s32 %s39, 1
      %s41 = scalar_select %p38, %s39, %s40
      %p44 = pneg %p38
      %p45 = scmp.eq.s32.totalorder %s29, 1
      %p46 = por %p44, %p45
      %p47 = scmp.ne.s32.totalorder %s39, %s42
      %p48 = scmp.eq.s32.totalorder %s29, 0
      %p49 = por %p47, %p48
      %p50 = scmp.ne.s32.totalorder %s39, %s42
      %p51 = scmp.eq.s32.totalorder %s34, 1
      %p52 = por %p50, %p51
      %p53 = scmp.ne.s32.totalorder %s42, %s43
      %p54 = scmp.eq.s32.totalorder %s34, 0
      %p55 = por %p53, %p54
      %p56 = scmp.ne.s32.totalorder %s42, %s43
      %p57 = scmp.eq.s32.totalorder %s35, 1
      %p58 = por %p56, %p57
      %p60 = scmp.ne.s32.totalorder %s43, %s59
      %p61 = scmp.eq.s32.totalorder %s35, 0
      %p62 = por %p60, %p61
      %s63 = ssub.s32 %s29, %s36
      %p64 = scmp.eq.s32.totalorder %s63, 0
      %s66 = sadd.s32 %s65, 1
      %s67 = scalar_select %p64, %s65, %s66
      %p70 = pneg %p64
      %p71 = scmp.eq.s32.totalorder %s29, 1
      %p72 = por %p70, %p71
      %p73 = scmp.ne.s32.totalorder %s65, %s68
      %p74 = scmp.eq.s32.totalorder %s29, 0
      %p75 = por %p73, %p74
      %p76 = scmp.ne.s32.totalorder %s65, %s68
      %p77 = scmp.eq.s32.totalorder %s34, 1
      %p78 = por %p76, %p77
      %p79 = scmp.ne.s32.totalorder %s68, %s69
      %p80 = scmp.eq.s32.totalorder %s34, 0
      %p81 = por %p79, %p80
      %p82 = scmp.ne.s32.totalorder %s68, %s69
      %p83 = scmp.eq.s32.totalorder %s35, 1
      %p84 = por %p82, %p83
      %p86 = scmp.ne.s32.totalorder %s69, %s85
      %p87 = scmp.eq.s32.totalorder %s35, 0
      %p88 = por %p86, %p87
      %s89 = ssub.s32 %s29, %s36
      %p90 = scmp.eq.s32.totalorder %s89, 0
      %s92 = sadd.s32 %s91, 1
      %s93 = scalar_select %p90, %s91, %s92
      %p96 = pneg %p90
      %p97 = scmp.eq.s32.totalorder %s29, 1
      %p98 = por %p96, %p97
      %p99 = scmp.ne.s32.totalorder %s91, %s94
      %p100 = scmp.eq.s32.totalorder %s29, 0
      %p101 = por %p99, %p100
      %p102 = scmp.ne.s32.totalorder %s91, %s94
      %p103 = scmp.eq.s32.totalorder %s34, 1
      %p104 = por %p102, %p103
      %p105 = scmp.ne.s32.totalorder %s94, %s95
      %p106 = scmp.eq.s32.totalorder %s34, 0
      %p107 = por %p105, %p106
      %p108 = scmp.ne.s32.totalorder %s94, %s95
      %p109 = scmp.eq.s32.totalorder %s35, 1
      %p110 = por %p108, %p109
      %p112 = scmp.ne.s32.totalorder %s95, %s111
      %p113 = scmp.eq.s32.totalorder %s35, 0
      %p114 = por %p112, %p113
      %s116 = sadd.s32 %s115, 1
      %p119 = scmp.eq.s32.totalorder %s29, 1
      %p120 = scmp.ne.s32.totalorder %s115, %s117
      %p121 = scmp.eq.s32.totalorder %s29, 0
      %p122 = por %p120, %p121
      %p123 = scmp.ne.s32.totalorder %s115, %s117
      %p124 = scmp.eq.s32.totalorder %s34, 1
      %p125 = por %p123, %p124
      %p126 = scmp.ne.s32.totalorder %s117, %s118
      %p127 = scmp.eq.s32.totalorder %s34, 0
      %p128 = por %p126, %p127
      %p129 = scmp.ne.s32.totalorder %s117, %s118
      %p130 = scmp.eq.s32.totalorder %s35, 1
      %p131 = por %p129, %p130
      %p133 = scmp.ne.s32.totalorder %s118, %s132
      %p134 = scmp.eq.s32.totalorder %s35, 0
      %p135 = por %p133, %p134
      %s137 = sadd.s32 %s136, 1
      %p140 = scmp.eq.s32.totalorder %s29, 1
      %p141 = scmp.ne.s32.totalorder %s136, %s138
      %p142 = scmp.eq.s32.totalorder %s29, 0
      %p143 = por %p141, %p142
      %p144 = scmp.ne.s32.totalorder %s136, %s138
      %p145 = scmp.eq.s32.totalorder %s34, 1
      %p146 = por %p144, %p145
      %p147 = scmp.ne.s32.totalorder %s138, %s139
      %p148 = scmp.eq.s32.totalorder %s34, 0
      %p149 = por %p147, %p148
      %p150 = scmp.ne.s32.totalorder %s138, %s139
      %p151 = scmp.eq.s32.totalorder %s35, 1
      %p152 = por %p150, %p151
      %p154 = scmp.ne.s32.totalorder %s139, %s153
      %p155 = scmp.eq.s32.totalorder %s35, 0
      %p156 = por %p154, %p155
      %s158 = sadd.s32 %s157, 1
      %p161 = scmp.eq.s32.totalorder %s29, 1
      %p162 = scmp.ne.s32.totalorder %s157, %s159
      %p163 = scmp.eq.s32.totalorder %s29, 0
      %p164 = por %p162, %p163
      %p165 = scmp.ne.s32.totalorder %s157, %s159
      %p166 = scmp.eq.s32.totalorder %s34, 1
      %p167 = por %p165, %p166
      %p168 = scmp.ne.s32.totalorder %s159, %s160
      %p169 = scmp.eq.s32.totalorder %s34, 0
      %p170 = por %p168, %p169
      %p171 = scmp.ne.s32.totalorder %s159, %s160
      %p172 = scmp.eq.s32.totalorder %s35, 1
      %p173 = por %p171, %p172
      %p175 = scmp.ne.s32.totalorder %s160, %s174
      %p176 = scmp.eq.s32.totalorder %s35, 0
      %p177 = por %p175, %p176
      %s179 = sadd.s32 %s178, 1
      %p182 = scmp.eq.s32.totalorder %s29, 1
      %p183 = scmp.ne.s32.totalorder %s178, %s180
      %p184 = scmp.eq.s32.totalorder %s29, 0
      %p185 = por %p183, %p184
      %p186 = scmp.ne.s32.totalorder %s178, %s180
      %p187 = scmp.eq.s32.totalorder %s34, 1
      %p188 = por %p186, %p187
      %p189 = scmp.ne.s32.totalorder %s180, %s181
      %p190 = scmp.eq.s32.totalorder %s34, 0
      %p191 = por %p189, %p190
      %p192 = scmp.ne.s32.totalorder %s180, %s181
      %p193 = scmp.eq.s32.totalorder %s35, 1
      %p194 = por %p192, %p193
      %p196 = scmp.ne.s32.totalorder %s181, %s195
      %p197 = scmp.eq.s32.totalorder %s35, 0
      %p198 = por %p196, %p197
      %s200 = sadd.s32 %s199, 1
      %p203 = scmp.eq.s32.totalorder %s29, 1
      %p204 = scmp.ne.s32.totalorder %s199, %s201
      %p205 = scmp.eq.s32.totalorder %s29, 0
      %p206 = por %p204, %p205
      %p207 = scmp.ne.s32.totalorder %s199, %s201
      %p208 = scmp.eq.s32.totalorder %s34, 1
      %p209 = por %p207, %p208
      %p210 = scmp.ne.s32.totalorder %s201, %s202
      %p211 = scmp.eq.s32.totalorder %s34, 0
      %p212 = por %p210, %p211
      %p213 = scmp.ne.s32.totalorder %s201, %s202
      %p214 = scmp.eq.s32.totalorder %s35, 1
      %p215 = por %p213, %p214
      %p217 = scmp.ne.s32.totalorder %s202, %s216
      %p218 = scmp.eq.s32.totalorder %s35, 0
      %p219 = por %p217, %p218
      %s221 = sadd.s32 %s220, 1
      %p224 = scmp.eq.s32.totalorder %s29, 1
      %p225 = scmp.ne.s32.totalorder %s220, %s222
      %p226 = scmp.eq.s32.totalorder %s29, 0
      %p227 = por %p225, %p226
      %p228 = scmp.ne.s32.totalorder %s220, %s222
      %p229 = scmp.eq.s32.totalorder %s34, 1
      %p230 = por %p228, %p229
      %p231 = scmp.ne.s32.totalorder %s222, %s223
      %p232 = scmp.eq.s32.totalorder %s34, 0
      %p233 = por %p231, %p232
      %p234 = scmp.ne.s32.totalorder %s222, %s223
      %p235 = scmp.eq.s32.totalorder %s35, 1
      %p236 = por %p234, %p235
      %p238 = scmp.ne.s32.totalorder %s223, %s237
      %p239 = scmp.eq.s32.totalorder %s35, 0
      %p240 = por %p238, %p239
      %s242 = sadd.s32 %s241, 1
      %p245 = scmp.eq.s32.totalorder %s29, 1
      %p246 = scmp.ne.s32.totalorder %s241, %s243
      %p247 = scmp.eq.s32.totalorder %s29, 0
      %p248 = por %p246, %p247
      %p249 = scmp.ne.s32.totalorder %s241, %s243
      %p250 = scmp.eq.s32.totalorder %s34, 1
      %p251 = por %p249, %p250
      %p252 = scmp.ne.s32.totalorder %s243, %s244
      %p253 = scmp.eq.s32.totalorder %s34, 0
      %p254 = por %p252, %p253
      %p255 = scmp.ne.s32.totalorder %s243, %s244
      %p256 = scmp.eq.s32.totalorder %s35, 1
      %p257 = por %p255, %p256
      %p259 = scmp.ne.s32.totalorder %s244, %s258
      %p260 = scmp.eq.s32.totalorder %s35, 0
      %p261 = por %p259, %p260
      %s263 = sadd.s32 %s262, 1
      %p266 = scmp.eq.s32.totalorder %s29, 1
      %p267 = scmp.ne.s32.totalorder %s262, %s264
      %p268 = scmp.eq.s32.totalorder %s29, 0
      %p269 = por %p267, %p268
      %p270 = scmp.ne.s32.totalorder %s262, %s264
      %p271 = scmp.eq.s32.totalorder %s34, 1
      %p272 = por %p270, %p271
      %p273 = scmp.ne.s32.totalorder %s264, %s265
      %p274 = scmp.eq.s32.totalorder %s34, 0
      %p275 = por %p273, %p274
      %p276 = scmp.ne.s32.totalorder %s264, %s265
      %p277 = scmp.eq.s32.totalorder %s35, 1
      %p278 = por %p276, %p277
      %p280 = scmp.ne.s32.totalorder %s265, %s279
      %p281 = scmp.eq.s32.totalorder %s35, 0
      %p282 = por %p280, %p281
      %s284 = sadd.s32 %s283, 1
      %p287 = scmp.eq.s32.totalorder %s29, 1
      %p288 = scmp.ne.s32.totalorder %s283, %s285
      %p289 = scmp.eq.s32.totalorder %s29, 0
      %p290 = por %p288, %p289
      %p291 = scmp.ne.s32.totalorder %s283, %s285
      %p292 = scmp.eq.s32.totalorder %s34, 1
      %p293 = por %p291, %p292
      %p294 = scmp.ne.s32.totalorder %s285, %s286
      %p295 = scmp.eq.s32.totalorder %s34, 0
      %p296 = por %p294, %p295
      %p297 = scmp.ne.s32.totalorder %s285, %s286
      %p298 = scmp.eq.s32.totalorder %s35, 1
      %p299 = por %p297, %p298
      %p301 = scmp.ne.s32.totalorder %s286, %s300
      %p302 = scmp.eq.s32.totalorder %s35, 0
      %p303 = por %p301, %p302
      %s305 = sadd.s32 %s304, 1
      %p308 = scmp.eq.s32.totalorder %s29, 1
      %p309 = scmp.ne.s32.totalorder %s304, %s306
      %p310 = scmp.eq.s32.totalorder %s29, 0
      %p311 = por %p309, %p310
      %p312 = scmp.ne.s32.totalorder %s304, %s306
      %p313 = scmp.eq.s32.totalorder %s34, 1
      %p314 = por %p312, %p313
      %p315 = scmp.ne.s32.totalorder %s306, %s307
      %p316 = scmp.eq.s32.totalorder %s34, 0
      %p317 = por %p315, %p316
      %p318 = scmp.ne.s32.totalorder %s306, %s307
      %p319 = scmp.eq.s32.totalorder %s35, 1
      %p320 = por %p318, %p319
      %p322 = scmp.ne.s32.totalorder %s307, %s321
      %p323 = scmp.eq.s32.totalorder %s35, 0
      %p324 = por %p322, %p323
      %s325 = ssub.s32 %s29, %s36
      %p326 = scmp.eq.s32.totalorder %s325, 0
      %s328 = sadd.s32 %s327, 1
      %s329 = scalar_select %p326, %s327, %s328
      %p332 = pneg %p326
      %p333 = scmp.eq.s32.totalorder %s29, 1
      %p334 = por %p332, %p333
      %p335 = scmp.ne.s32.totalorder %s327, %s330
      %p336 = scmp.eq.s32.totalorder %s29, 0
      %p337 = por %p335, %p336
      %p338 = scmp.ne.s32.totalorder %s327, %s330
      %p339 = scmp.eq.s32.totalorder %s34, 1
      %p340 = por %p338, %p339
      %p341 = scmp.ne.s32.totalorder %s330, %s331
      %p342 = scmp.eq.s32.totalorder %s34, 0
      %p343 = por %p341, %p342
      %p344 = scmp.ne.s32.totalorder %s330, %s331
      %p345 = scmp.eq.s32.totalorder %s35, 1
      %p346 = por %p344, %p345
      %p348 = scmp.ne.s32.totalorder %s331, %s347
      %p349 = scmp.eq.s32.totalorder %s35, 0
      %p350 = por %p348, %p349
      %s351 = ssub.s32 %s29, %s36
      %p352 = scmp.eq.s32.totalorder %s351, 0
      %s354 = sadd.s32 %s353, 1
      %s355 = scalar_select %p352, %s353, %s354
      %p358 = pneg %p352
      %p359 = scmp.eq.s32.totalorder %s29, 1
      %p360 = por %p358, %p359
      %p361 = scmp.ne.s32.totalorder %s353, %s356
      %p362 = scmp.eq.s32.totalorder %s29, 0
      %p363 = por %p361, %p362
      %p364 = scmp.ne.s32.totalorder %s353, %s356
      %p365 = scmp.eq.s32.totalorder %s34, 1
      %p366 = por %p364, %p365
      %p367 = scmp.ne.s32.totalorder %s356, %s357
      %p368 = scmp.eq.s32.totalorder %s34, 0
      %p369 = por %p367, %p368
      %p370 = scmp.ne.s32.totalorder %s356, %s357
      %p371 = scmp.eq.s32.totalorder %s35, 1
      %p372 = por %p370, %p371
      %p374 = scmp.ne.s32.totalorder %s357, %s373
      %p375 = scmp.eq.s32.totalorder %s35, 0
      %p376 = por %p374, %p375
      %p377 = scmp.le.s32.totalorder 1, %s29
      %p378 = scmp.lt.s32.totalorder %s29, 3
      %p379 = pnand %p377, %p378
      %p380 = pneg %p379
      // Predicated region
      $region9: #{smma_forward.1} parent=5 // pred_check
        _
      $region10: #{smma_forward.1} parent=5 // pred_check_branch
        %382 = sbr.rel (%p379) target = $region12
      $region11: #{smma_forward.1} parent=5 // pred_region
        %s383 = ssub.s32 %s29, 1
        // Predicated region
        $region13: #{smma_forward.1} parent=11 // pred_check
          %p384 = pneg %p128
        $region14: #{smma_forward.1} parent=11 // pred_check_branch
          %386 = sbr.rel (%p384) target = $region16
        $region15: #{smma_forward.1} parent=11 // pred_region
          %388 = vsyncadd [#allocation8], 0
          %s389 = sshll.u32 %s3, 4
          %s390 = int_to_ptr.hbm [resolvable:$true] %s389
          %s391 = sshll.u32 [#allocation7], 4
          %s392 = int_to_ptr.vmem [resolvable:$true] %s391
          %397 = dma.hbm_to_vmem [thread:$0]  %s390, 256, %s392, [#allocation8], 64, 64, 4
        $region16: #{smma_forward.1} parent=11 // pred_fallthru
          _
        // Predicated region
        $region17: #{smma_forward.1} parent=11 // pred_check
          %p398 = pneg %p149
        $region18: #{smma_forward.1} parent=11 // pred_check_branch
          %400 = sbr.rel (%p398) target = $region20
        $region19: #{smma_forward.1} parent=11 // pred_region
          _
        $region20: #{smma_forward.1} parent=11 // pred_fallthru
          _
        // Predicated region
        $region21: #{smma_forward.1} parent=11 // pred_check
          %p401 = pneg %p170
        $region22: #{smma_forward.1} parent=11 // pred_check_branch
          %403 = sbr.rel (%p401) target = $region24
        $region23: #{smma_forward.1} parent=11 // pred_region
          %405 = vsyncadd [#allocation8], 0
          %s406 = sshll.u32 %s5, 4
          %s407 = int_to_ptr.hbm [resolvable:$true] %s406
          %s408 = sshll.u32 [#allocation9], 4
          %s409 = int_to_ptr.vmem [resolvable:$true] %s408
          %414 = dma.hbm_to_vmem [thread:$0]  %s407, 256, %s409, [#allocation8], 64, 64, 4
        $region24: #{smma_forward.1} parent=11 // pred_fallthru
          _
        // Predicated region
        $region25: #{smma_forward.1} parent=11 // pred_check
          %p415 = pneg %p191
        $region26: #{smma_forward.1} parent=11 // pred_check_branch
          %417 = sbr.rel (%p415) target = $region28
        $region27: #{smma_forward.1} parent=11 // pred_region
          _
        $region28: #{smma_forward.1} parent=11 // pred_fallthru
          _
        // Predicated region
        $region29: #{smma_forward.1} parent=11 // pred_check
          %p418 = pneg %p212
        $region30: #{smma_forward.1} parent=11 // pred_check_branch
          %420 = sbr.rel (%p418) target = $region32
        $region31: #{smma_forward.1} parent=11 // pred_region
          %422 = vsyncadd [#allocation11], 0
          %s423 = sshll.u32 %s7, 4
          %s424 = int_to_ptr.hbm [resolvable:$true] %s423
          %s425 = sshll.u32 [#allocation10], 4
          %s426 = int_to_ptr.vmem [resolvable:$true] %s425
          %431 = dma.hbm_to_vmem [thread:$0]  %s424, 256, %s426, [#allocation11], 64, 64, 4
        $region32: #{smma_forward.1} parent=11 // pred_fallthru
          _
        // Predicated region
        $region33: #{smma_forward.1} parent=11 // pred_check
          %p432 = pneg %p233
        $region34: #{smma_forward.1} parent=11 // pred_check_branch
          %434 = sbr.rel (%p432) target = $region36
        $region35: #{smma_forward.1} parent=11 // pred_region
          _
        $region36: #{smma_forward.1} parent=11 // pred_fallthru
          _
        // Predicated region
        $region37: #{smma_forward.1} parent=11 // pred_check
          %p435 = pneg %p254
        $region38: #{smma_forward.1} parent=11 // pred_check_branch
          %437 = sbr.rel (%p435) target = $region40
        $region39: #{smma_forward.1} parent=11 // pred_region
          _
        $region40: #{smma_forward.1} parent=11 // pred_fallthru
          _
        // Predicated region
        $region41: #{smma_forward.1} parent=11 // pred_check
          %p438 = pneg %p275
        $region42: #{smma_forward.1} parent=11 // pred_check_branch
          %440 = sbr.rel (%p438) target = $region44
        $region43: #{smma_forward.1} parent=11 // pred_region
          _
        $region44: #{smma_forward.1} parent=11 // pred_fallthru
          _
        // Predicated region
        $region45: #{smma_forward.1} parent=11 // pred_check
          %p441 = pneg %p296
        $region46: #{smma_forward.1} parent=11 // pred_check_branch
          %443 = sbr.rel (%p441) target = $region48
        $region47: #{smma_forward.1} parent=11 // pred_region
          _
        $region48: #{smma_forward.1} parent=11 // pred_fallthru
          _
        // Predicated region
        $region49: #{smma_forward.1} parent=11 // pred_check
          %p444 = pneg %p317
        $region50: #{smma_forward.1} parent=11 // pred_check_branch
          %446 = sbr.rel (%p444) target = $region52
        $region51: #{smma_forward.1} parent=11 // pred_region
          _
        $region52: #{smma_forward.1} parent=11 // pred_fallthru
          _
      $region12: #{smma_forward.1} parent=5 // pred_fallthru
        _
      %p447 = scmp.lt.s32.totalorder %s29, 2
      // Predicated region
      $region53: #{smma_forward.1} parent=5 // pred_check
        %p448 = pneg %p447
      $region54: #{smma_forward.1} parent=5 // pred_check_branch
        %450 = sbr.rel (%p448) target = $region56
      $region55: #{smma_forward.1} parent=5 // pred_region
        // Predicated region
        $region57: #{smma_forward.1} parent=55 // pred_check
          %p451 = pneg %p49
        $region58: #{smma_forward.1} parent=55 // pred_check_branch
          %453 = sbr.rel (%p451) target = $region60
        $region59: #{smma_forward.1} parent=55 // pred_region
          %p454 = scmp.lt.s32.totalorder %s29, 1
          %s455 = scalar_select %p454, %s29, 1
          %s456 = smul.addr %s455, 8
          %s457 = scalar_lea.vmem %s0, %s456
        $region60: #{smma_forward.1} parent=55 // pred_fallthru
          _
        // Predicated region
        $region61: #{smma_forward.1} parent=55 // pred_check
          %p458 = pneg %p75
        $region62: #{smma_forward.1} parent=55 // pred_check_branch
          %460 = sbr.rel (%p458) target = $region64
        $region63: #{smma_forward.1} parent=55 // pred_region
          %p461 = scmp.lt.s32.totalorder %s29, 1
          %s462 = scalar_select %p461, %s29, 1
          %s463 = smul.addr %s462, 2
          %s464 = smul.addr %s463, 8
          %s465 = scalar_lea.vmem %s1, %s464
        $region64: #{smma_forward.1} parent=55 // pred_fallthru
          _
        // Predicated region
        $region65: #{smma_forward.1} parent=55 // pred_check
          %p466 = pneg %p101
        $region66: #{smma_forward.1} parent=55 // pred_check_branch
          %468 = sbr.rel (%p466) target = $region68
        $region67: #{smma_forward.1} parent=55 // pred_region
          %s469 = sand.u32 %s91, 1
          %s470 = scalar_lea.sflag [#allocation5], %s469
          %s471 = sand.u32 %s91, 1
          %s472 = smul.addr %s471, 16
          %s473 = scalar_lea.vmem [#allocation4], %s472
          %475 = vsyncadd %s470, 0
          %s476 = smul.addr %s29, 2
          %s477 = smul.addr %s476, 8
          %s478 = scalar_lea.hbm %s2, %s477
          %s479 = sshll.u32 %s478, 4
          %s480 = int_to_ptr.hbm [resolvable:$true] %s479
          %s481 = sshll.u32 %s473, 4
          %s482 = int_to_ptr.vmem [resolvable:$true] %s481
          %487 = dma.hbm_to_vmem [thread:$0]  %s480, 256, %s482, %s470, 128, 128, 8
        $region68: #{smma_forward.1} parent=55 // pred_fallthru
          _
      $region56: #{smma_forward.1} parent=5 // pred_fallthru
        _
      %p488 = scmp.le.s32.totalorder 1, %s29
      %p489 = scmp.lt.s32.totalorder %s29, 3
      %p490 = pnand %p488, %p489
      %p491 = pneg %p490
      // Predicated region
      $region69: #{smma_forward.1} parent=5 // pred_check
        _
      $region70: #{smma_forward.1} parent=5 // pred_check_branch
        %493 = sbr.rel (%p490) target = $region72
      $region71: #{smma_forward.1} parent=5 // pred_region
        %s494 = ssub.s32 %s29, 1
        %s495 = sand.u32 %s94, 1
        %s496 = scalar_lea.sflag [#allocation5], %s495
        %s497 = sand.u32 %s94, 1
        %s498 = smul.addr %s497, 16
        %s499 = scalar_lea.vmem [#allocation4], %s498
        // Predicated region
        $region73: #{smma_forward.1} parent=71 // pred_check
          %p500 = pneg %p107
        $region74: #{smma_forward.1} parent=71 // pred_check_branch
          %502 = sbr.rel (%p500) target = $region76
        $region75: #{smma_forward.1} parent=71 // pred_region
          %504 = dma.done %s496, 256
        $region76: #{smma_forward.1} parent=71 // pred_fallthru
          _
        // Predicated region
        $region77: #{smma_forward.1} parent=71 // pred_check
          %p505 = pneg %p128
        $region78: #{smma_forward.1} parent=71 // pred_check_branch
          %507 = sbr.rel (%p505) target = $region80
        $region79: #{smma_forward.1} parent=71 // pred_region
          %509 = dma.done [#allocation8], 256
        $region80: #{smma_forward.1} parent=71 // pred_fallthru
          _
        // Predicated region
        $region81: #{smma_forward.1} parent=71 // pred_check
          %p510 = pneg %p170
        $region82: #{smma_forward.1} parent=71 // pred_check_branch
          %512 = sbr.rel (%p510) target = $region84
        $region83: #{smma_forward.1} parent=71 // pred_region
          %514 = dma.done [#allocation8], 256
        $region84: #{smma_forward.1} parent=71 // pred_fallthru
          _
        // Predicated region
        $region85: #{smma_forward.1} parent=71 // pred_check
          %p515 = pneg %p212
        $region86: #{smma_forward.1} parent=71 // pred_check_branch
          %517 = sbr.rel (%p515) target = $region88
        $region87: #{smma_forward.1} parent=71 // pred_region
          %519 = dma.done [#allocation11], 256
        $region88: #{smma_forward.1} parent=71 // pred_fallthru
          _
        %p520 = scmp.lt.s32.totalorder %s34, 1
        %s521 = scalar_select %p520, %s34, 1
        %s522 = smul.addr %s521, 8
        %s523 = scalar_lea.vmem %s0, %s522
        %p524 = pneg %p55
        %p525 = pneg %p52
        %p526 = scmp.lt.s32.totalorder %s34, 1
        %s527 = scalar_select %p526, %s34, 1
        %s528 = smul.addr %s527, 2
        %s529 = smul.addr %s528, 8
        %s530 = scalar_lea.vmem %s1, %s529
        %p531 = pneg %p81
        %p532 = pneg %p78
        %s533 = sand.u32 %s94, 1
        %s534 = scalar_lea.sflag [#allocation5], %s533
        %s535 = sand.u32 %s94, 1
        %s536 = smul.addr %s535, 16
        %s537 = scalar_lea.vmem [#allocation4], %s536
        %p538 = pneg %p107
        %p539 = pneg %p104
        %p540 = pneg %p128
        %p541 = pneg %p125
        %p542 = pneg %p149
        %p543 = pneg %p146
        %p544 = pneg %p170
        %p545 = pneg %p167
        %p546 = pneg %p191
        %p547 = pneg %p188
        %p548 = pneg %p212
        %p549 = pneg %p209
        %p550 = pneg %p233
        %p551 = pneg %p230
        %p552 = pneg %p254
        %p553 = pneg %p251
        %p554 = pneg %p275
        %p555 = pneg %p272
        %p556 = pneg %p296
        %p557 = pneg %p293
        %p558 = pneg %p317
        %p559 = pneg %p314
        %p560 = pneg %p343
        %p561 = pneg %p340
        %s562 = sand.u32 %s330, 1
        %s563 = scalar_lea.sflag [#allocation6], %s562
        %s564 = sand.u32 %s330, 1
        %s565 = smul.addr %s564, 8
        %s566 = scalar_lea.vmem [#allocation12], %s565
        %p567 = pneg %p369
        %p568 = pneg %p366
        %p569 = scmp.lt.s32.totalorder %s34, 1
        %s570 = scalar_select %p569, %s34, 1
        %s571 = smul.addr %s570, 8
        %s572 = scalar_lea.vmem %s14, %s571
        %p573 = scmp.lt.s32.totalorder %s34, 1
        %s574 = scalar_select %p573, %s34, 1
        %s575 = smul.addr %s574, 8
        %s576 = scalar_lea.vmem %s0, %s575
        %p577 = scmp.lt.s32.totalorder %s34, 1
        %s578 = scalar_select %p577, %s34, 1
        %s579 = smul.addr %s578, 2
        %s580 = smul.addr %s579, 8
        %s581 = scalar_lea.vmem %s1, %s580
        %p582 = scmp.lt.s32.totalorder %s34, 1
        %s583 = scalar_select %p582, %s34, 1
        %s584 = smul.addr %s583, 8
        %s585 = scalar_lea.vmem %s14, %s584
        %v587 = vld [vmem:[%s576] sm:$0xff]
        %v588 = vpack.c.bf16 %v587, %v587
        %v589 = vld [vmem:[%s581] sm:$0xff]
        %v590 = vld [vmem:[%s581 + $0x8] sm:$0xff]
        %v591 = vpack.c.bf16 %v590, %v589
        %v592 = vld [vmem:[%s499] sm:$0xff]
        %v593 = vld [vmem:[%s499 + $0x8] sm:$0xff]
        %v594 = vpack.c.bf16 %v593, %v592
        %v595 = vld [vmem:[#allocation7] sm:$0xf]
        %v596 = vld [vmem:[#allocation7 + $0x4] sm:$0xf]
        %v597 = vld [vmem:[#allocation7 + $0x8] sm:$0xf]
        %v598 = vld [vmem:[#allocation7 + $0xc] sm:$0xf]
        %v599 = vld [vmem:[%s4] sm:$0x1]
        %v601 = vperm.slane %v599, 0
        %v607 = vunpack.c.l.b16 %v595
        %v608 = vunpack.c.l.b16 %v596
        %v609 = vunpack.c.l.b16 %v597
        %v610 = vunpack.c.l.b16 %v598
        %v611 = vpack.c.b16 %v608, %v607
        %v612 = vpack.c.b16 %v610, %v609
        %vm615 = vcmask 261120
        %v617 = vsel %vm615, %v588, 0
        %619 = vmatpush.bf16.msra.mxu0 0
        %620 = vmatpush.bf16.msra.mxu0 0
        %621 = vmatpush.bf16.msra.mxu0 0
        %622 = vmatpush.bf16.msra.mxu0 0
        %623 = vmatpush.bf16.msra.mxu0 0
        %624 = vmatpush.bf16.msra.mxu0 0
        %625 = vmatpush.bf16.msra.mxu0 %v612
        %626 = vmatpush.bf16.msra.mxu0 %v611
        %627 = vmatmul.bf16.gmra.mxu0 %v617
        %v628 = vpop.f32.mrf.mxu0
        %v629 = vadd.f32 %v601, %v628
        %v630 = vpop.f32.mrf.mxu0
        %631 = vdwg.mxu0
        %v632 = vpack.c.bf16 %v629, %v629
        %v633 = vld [vmem:[#allocation9] sm:$0xf]
        %v634 = vld [vmem:[#allocation9 + $0x4] sm:$0xf]
        %v635 = vld [vmem:[#allocation9 + $0x8] sm:$0xf]
        %v636 = vld [vmem:[#allocation9 + $0xc] sm:$0xf]
        %v637 = vld [vmem:[%s6] sm:$0x1]
        %v639 = vperm.slane %v637, 0
        %v645 = vunpack.c.l.b16 %v633
        %v646 = vunpack.c.l.b16 %v634
        %v647 = vunpack.c.l.b16 %v635
        %v648 = vunpack.c.l.b16 %v636
        %v649 = vpack.c.b16 %v646, %v645
        %v650 = vpack.c.b16 %v648, %v647
        %v654 = vsel %vm615, %v591, 0
        %656 = vmatpush.bf16.msra.mxu0 0
        %657 = vmatpush.bf16.msra.mxu0 0
        %658 = vmatpush.bf16.msra.mxu0 0
        %659 = vmatpush.bf16.msra.mxu0 0
        %660 = vmatpush.bf16.msra.mxu0 0
        %661 = vmatpush.bf16.msra.mxu0 0
        %662 = vmatpush.bf16.msra.mxu0 %v650
        %663 = vmatpush.bf16.msra.mxu0 %v649
        %664 = vmatmul.bf16.gmra.mxu0 %v654
        %v665 = vpop.f32.mrf.mxu0
        %v666 = vadd.f32 %v639, %v665
        %v667 = vpop.f32.mrf.mxu0
        %v668 = vadd.f32 %v639, %v667
        %669 = vdwg.mxu0
        %v670 = vpack.c.bf16 %v666, %v666
        %v671 = vpack.c.bf16 %v668, %v668
        %v672 = vld [vmem:[#allocation10] sm:$0xf]
        %v673 = vld [vmem:[#allocation10 + $0x4] sm:$0xf]
        %v674 = vld [vmem:[#allocation10 + $0x8] sm:$0xf]
        %v675 = vld [vmem:[#allocation10 + $0xc] sm:$0xf]
        %v676 = vld [vmem:[%s8] sm:$0x1]
        %v678 = vperm.slane %v676, 0
        %v684 = vunpack.c.l.b16 %v672
        %v685 = vunpack.c.l.b16 %v673
        %v686 = vunpack.c.l.b16 %v674
        %v687 = vunpack.c.l.b16 %v675
        %v688 = vpack.c.b16 %v685, %v684
        %v689 = vpack.c.b16 %v687, %v686
        %v693 = vsel %vm615, %v594, 0
        %695 = vmatpush.bf16.msra.mxu0 0
        %696 = vmatpush.bf16.msra.mxu0 0
        %697 = vmatpush.bf16.msra.mxu0 0
        %698 = vmatpush.bf16.msra.mxu0 0
        %699 = vmatpush.bf16.msra.mxu0 0
        %700 = vmatpush.bf16.msra.mxu0 0
        %701 = vmatpush.bf16.msra.mxu0 %v689
        %702 = vmatpush.bf16.msra.mxu0 %v688
        %703 = vmatmul.bf16.gmra.mxu0 %v693
        %v704 = vpop.f32.mrf.mxu0
        %v705 = vadd.f32 %v678, %v704
        %v706 = vpop.f32.mrf.mxu0
        %v707 = vadd.f32 %v678, %v706
        %708 = vdwg.mxu0
        %v709 = vpack.c.bf16 %v705, %v705
        %v710 = vpack.c.bf16 %v707, %v707
        %v713 = vunpack.c.l.b16 %v670
        %v714 = vunpack.c.l.b16 %v671
        %v715 = vpack.c.b16 %v714, %v713
        %vm716 = vcmask 64512
        %v718 = vsel %vm716, %v632, 0
        %v721 = vsel %vm716, %v715, 0
        %723 = vmatpush.bf16.xpose.msra.mxu0 0
        %724 = vmatpush.bf16.xpose.msra.mxu0 0
        %725 = vmatpush.bf16.xpose.msra.mxu0 0
        %726 = vmatpush.bf16.xpose.msra.mxu0 0
        %727 = vmatpush.bf16.xpose.msra.mxu0 0
        %728 = vmatpush.bf16.xpose.msra.mxu0 0
        %729 = vmatpush.bf16.xpose.msra.mxu0 0
        %730 = vmatpush.bf16.xpose.msra.mxu0 %v721
        %731 = vmatmul.bf16.gmra.mxu0 %v718
        %v732 = vpop.f32.mrf.mxu0
        %v733 = vadd.f32 0.0, %v732
        %v734 = vpop.f32.mrf.mxu0
        %735 = vdwg.mxu0
        %vm736 = vcmask 130048
        %v737 = vsel %vm736, %v733, -inf
        %738 = vmax.xlane.f32.xlu0 %v737
        %v739 = vpop.xlane.xlu0 %738
        %v740 = vsub.f32 %v733, %v739
        %v741 = vmul.f32 %v740, 1.442695
        %v742 = vpow.pop %v741
        %v743 = vsel %vm736, %v742, 0.0
        %744 = vadd.xlane.f32.xlu0 %v743
        %v745 = vpop.xlane.xlu0 %744
        %v746 = vrcp.pop %v745
        %v747 = vmul.f32 %v742, %v746
        %748 = vst.msk [vmem:[#allocation2] sm:$0xff] %vm736, %v747
        %v749 = vpack.c.bf16 %v747, %v747
        %v752 = vunpack.c.l.b16 %v709
        %v753 = vunpack.c.l.b16 %v710
        %v754 = vpack.c.b16 %v753, %v752
        %v757 = vsel %vm736, %v749, 0
        %759 = vmatpush.bf16.msra.mxu0 0
        %760 = vmatpush.bf16.msra.mxu0 0
        %761 = vmatpush.bf16.msra.mxu0 0
        %762 = vmatpush.bf16.msra.mxu0 0
        %763 = vmatpush.bf16.msra.mxu0 0
        %764 = vmatpush.bf16.msra.mxu0 0
        %765 = vmatpush.bf16.msra.mxu0 0
        %766 = vmatpush.bf16.msra.mxu0 %v754
        %767 = vmatmul.bf16.gmra.mxu0 %v757
        %v768 = vpop.f32.mrf.mxu0
        %v769 = vadd.f32 0.0, %v768
        %v770 = vpop.f32.mrf.mxu0
        %771 = vdwg.mxu0
        %772 = vst.msk [vmem:[#allocation3] sm:$0xff] %vm716, %v769
        %v773 = vsel %vm736, %v747, -inf
        %v774 = vrot.slane %v773, 4
        %v775 = vmax.f32 %v773, %v774
        %v776 = vrot.slane %v775, 2
        %v777 = vmax.f32 %v775, %v776
        %v778 = vrot.slane %v777, 1
        %v779 = vmax.f32 %v777, %v778
        %vm780 = vcmask 122880
        %v781 = vsel %vm780, %v779, 0.0
        %782 = vadd.xlane.f32.xlu0 %v781
        %v783 = vpop.xlane.xlu0 %782
        %v784 = vrot.slane %v783, 4
        %v785 = vadd.f32 %v783, %v784
        %v786 = vrot.slane %v785, 2
        %v787 = vadd.f32 %v785, %v786
        %v788 = vrot.slane %v787, 1
        %v789 = vadd.f32 %v787, %v788
        %s790 = vtos %v789
        %v792 = vunpack.c.l.b16 %v632
        %v793 = vpack.c.b16 %v792, %v792
        %794 = vrot.lane.b32.xlu0 %v793, 120
        %v795 = vpop.permute.xlu0 %794
        %796 = vrot.lane.b32.xlu0 %v715, 120
        %v797 = vpop.permute.xlu0 %796
        %v799 = vsel %vm716, %v795, 0
        %v802 = vsel %vm716, %v797, 0
        %804 = vmatpush.bf16.xpose.msra.mxu0 0
        %805 = vmatpush.bf16.xpose.msra.mxu0 0
        %806 = vmatpush.bf16.xpose.msra.mxu0 0
        %807 = vmatpush.bf16.xpose.msra.mxu0 0
        %808 = vmatpush.bf16.xpose.msra.mxu0 0
        %809 = vmatpush.bf16.xpose.msra.mxu0 0
        %810 = vmatpush.bf16.xpose.msra.mxu0 0
        %811 = vmatpush.bf16.xpose.msra.mxu0 %v802
        %812 = vmatmul.bf16.gmra.mxu0 %v799
        %v813 = vpop.f32.mrf.mxu0
        %v814 = vadd.f32 0.0, %v813
        %v815 = vpop.f32.mrf.mxu0
        %816 = vdwg.mxu0
        %v817 = vsel %vm736, %v814, -inf
        %818 = vmax.xlane.f32.xlu0 %v817
        %v819 = vpop.xlane.xlu0 %818
        %v820 = vsub.f32 %v814, %v819
        %v821 = vmul.f32 %v820, 1.442695
        %v822 = vpow.pop %v821
        %v823 = vsel %vm736, %v822, 0.0
        %824 = vadd.xlane.f32.xlu0 %v823
        %v825 = vpop.xlane.xlu0 %824
        %v826 = vrcp.pop %v825
        %v827 = vmul.f32 %v822, %v826
        %s828 = scalar_lea.vmem [#allocation2], 8
        %829 = vst.msk [vmem:[%s828] sm:$0xff] %vm736, %v827
        %v830 = vpack.c.bf16 %v827, %v827
        %831 = vrot.lane.b32.xlu0 %v754, 120
        %v832 = vpop.permute.xlu0 %831
        %v835 = vsel %vm736, %v830, 0
        %837 = vmatpush.bf16.msra.mxu0 0
        %838 = vmatpush.bf16.msra.mxu0 0
        %839 = vmatpush.bf16.msra.mxu0 0
        %840 = vmatpush.bf16.msra.mxu0 0
        %841 = vmatpush.bf16.msra.mxu0 0
        %842 = vmatpush.bf16.msra.mxu0 0
        %843 = vmatpush.bf16.msra.mxu0 0
        %844 = vmatpush.bf16.msra.mxu0 %v832
        %845 = vmatmul.bf16.gmra.mxu0 %v835
        %v846 = vpop.f32.mrf.mxu0
        %v847 = vadd.f32 0.0, %v846
        %v848 = vpop.f32.mrf.mxu0
        %849 = vdwg.mxu0
        %851 = vrot.lane.b32.xlu0 %v847, 8
        %v852 = vpop.permute.xlu0 %851
        %vm854 = vcmask 130112
        %855 = vst.msk [vmem:[#allocation3] sm:$0xff] %vm854, %v852
        %v856 = vsel %vm736, %v827, -inf
        %v857 = vrot.slane %v856, 4
        %v858 = vmax.f32 %v856, %v857
        %v859 = vrot.slane %v858, 2
        %v860 = vmax.f32 %v858, %v859
        %v861 = vrot.slane %v860, 1
        %v862 = vmax.f32 %v860, %v861
        %v863 = vsel %vm780, %v862, 0.0
        %864 = vadd.xlane.f32.xlu0 %v863
        %v865 = vpop.xlane.xlu0 %864
        %v866 = vrot.slane %v865, 4
        %v867 = vadd.f32 %v865, %v866
        %v868 = vrot.slane %v867, 2
        %v869 = vadd.f32 %v867, %v868
        %v870 = vrot.slane %v869, 1
        %v871 = vadd.f32 %v869, %v870
        %s872 = vtos %v871
        %p873 = scmp.gt.f32.partialorder %s872, %s790
        %s874 = scalar_select %p873, %s872, %s790
        %s875 = scalar_select %p873, 1, 0
        %876 = vrot.lane.b32.xlu0 %v793, 112
        %v877 = vpop.permute.xlu0 %876
        %878 = vrot.lane.b32.xlu0 %v715, 112
        %v879 = vpop.permute.xlu0 %878
        %v881 = vsel %vm716, %v877, 0
        %v884 = vsel %vm716, %v879, 0
        %886 = vmatpush.bf16.xpose.msra.mxu0 0
        %887 = vmatpush.bf16.xpose.msra.mxu0 0
        %888 = vmatpush.bf16.xpose.msra.mxu0 0
        %889 = vmatpush.bf16.xpose.msra.mxu0 0
        %890 = vmatpush.bf16.xpose.msra.mxu0 0
        %891 = vmatpush.bf16.xpose.msra.mxu0 0
        %892 = vmatpush.bf16.xpose.msra.mxu0 0
        %893 = vmatpush.bf16.xpose.msra.mxu0 %v884
        %894 = vmatmul.bf16.gmra.mxu0 %v881
        %v895 = vpop.f32.mrf.mxu0
        %v896 = vadd.f32 0.0, %v895
        %v897 = vpop.f32.mrf.mxu0
        %898 = vdwg.mxu0
        %v899 = vsel %vm736, %v896, -inf
        %900 = vmax.xlane.f32.xlu0 %v899
        %v901 = vpop.xlane.xlu0 %900
        %v902 = vsub.f32 %v896, %v901
        %v903 = vmul.f32 %v902, 1.442695
        %v904 = vpow.pop %v903
        %v905 = vsel %vm736, %v904, 0.0
        %906 = vadd.xlane.f32.xlu0 %v905
        %v907 = vpop.xlane.xlu0 %906
        %v908 = vrcp.pop %v907
        %v909 = vmul.f32 %v904, %v908
        %s910 = scalar_lea.vmem [#allocation2], 16
        %911 = vst.msk [vmem:[%s910] sm:$0xff] %vm736, %v909
        %v912 = vpack.c.bf16 %v909, %v909
        %913 = vrot.lane.b32.xlu0 %v754, 112
        %v914 = vpop.permute.xlu0 %913
        %v917 = vsel %vm736, %v912, 0
        %919 = vmatpush.bf16.msra.mxu0 0
        %920 = vmatpush.bf16.msra.mxu0 0
        %921 = vmatpush.bf16.msra.mxu0 0
        %922 = vmatpush.bf16.msra.mxu0 0
        %923 = vmatpush.bf16.msra.mxu0 0
        %924 = vmatpush.bf16.msra.mxu0 0
        %925 = vmatpush.bf16.msra.mxu0 0
        %926 = vmatpush.bf16.msra.mxu0 %v914
        %927 = vmatmul.bf16.gmra.mxu0 %v917
        %v928 = vpop.f32.mrf.mxu0
        %v929 = vadd.f32 0.0, %v928
        %v930 = vpop.f32.mrf.mxu0
        %931 = vdwg.mxu0
        %933 = vrot.lane.b32.xlu0 %v929, 16
        %v934 = vpop.permute.xlu0 %933
        %vm936 = vcmask 195712
        %937 = vst.msk [vmem:[#allocation3] sm:$0xff] %vm936, %v934
        %v938 = vsel %vm736, %v909, -inf
        %v939 = vrot.slane %v938, 4
        %v940 = vmax.f32 %v938, %v939
        %v941 = vrot.slane %v940, 2
        %v942 = vmax.f32 %v940, %v941
        %v943 = vrot.slane %v942, 1
        %v944 = vmax.f32 %v942, %v943
        %v945 = vsel %vm780, %v944, 0.0
        %946 = vadd.xlane.f32.xlu0 %v945
        %v947 = vpop.xlane.xlu0 %946
        %v948 = vrot.slane %v947, 4
        %v949 = vadd.f32 %v947, %v948
        %v950 = vrot.slane %v949, 2
        %v951 = vadd.f32 %v949, %v950
        %v952 = vrot.slane %v951, 1
        %v953 = vadd.f32 %v951, %v952
        %s954 = vtos %v953
        %p955 = scmp.gt.f32.partialorder %s954, %s874
        %s956 = scalar_select %p955, %s954, %s874
        %s957 = scalar_select %p955, 2, %s875
        %958 = vrot.lane.b32.xlu0 %v793, 104
        %v959 = vpop.permute.xlu0 %958
        %960 = vrot.lane.b32.xlu0 %v715, 104
        %v961 = vpop.permute.xlu0 %960
        %v963 = vsel %vm716, %v959, 0
        %v966 = vsel %vm716, %v961, 0
        %968 = vmatpush.bf16.xpose.msra.mxu0 0
        %969 = vmatpush.bf16.xpose.msra.mxu0 0
        %970 = vmatpush.bf16.xpose.msra.mxu0 0
        %971 = vmatpush.bf16.xpose.msra.mxu0 0
        %972 = vmatpush.bf16.xpose.msra.mxu0 0
        %973 = vmatpush.bf16.xpose.msra.mxu0 0
        %974 = vmatpush.bf16.xpose.msra.mxu0 0
        %975 = vmatpush.bf16.xpose.msra.mxu0 %v966
        %976 = vmatmul.bf16.gmra.mxu0 %v963
        %v977 = vpop.f32.mrf.mxu0
        %v978 = vadd.f32 0.0, %v977
        %v979 = vpop.f32.mrf.mxu0
        %980 = vdwg.mxu0
        %v981 = vsel %vm736, %v978, -inf
        %982 = vmax.xlane.f32.xlu0 %v981
        %v983 = vpop.xlane.xlu0 %982
        %v984 = vsub.f32 %v978, %v983
        %v985 = vmul.f32 %v984, 1.442695
        %v986 = vpow.pop %v985
        %v987 = vsel %vm736, %v986, 0.0
        %988 = vadd.xlane.f32.xlu0 %v987
        %v989 = vpop.xlane.xlu0 %988
        %v990 = vrcp.pop %v989
        %v991 = vmul.f32 %v986, %v990
        %s992 = scalar_lea.vmem [#allocation2], 24
        %993 = vst.msk [vmem:[%s992] sm:$0xff] %vm736, %v991
        %v994 = vpack.c.bf16 %v991, %v991
        %995 = vrot.lane.b32.xlu0 %v754, 104
        %v996 = vpop.permute.xlu0 %995
        %v999 = vsel %vm736, %v994, 0
        %1001 = vmatpush.bf16.msra.mxu0 0
        %1002 = vmatpush.bf16.msra.mxu0 0
        %1003 = vmatpush.bf16.msra.mxu0 0
        %1004 = vmatpush.bf16.msra.mxu0 0
        %1005 = vmatpush.bf16.msra.mxu0 0
        %1006 = vmatpush.bf16.msra.mxu0 0
        %1007 = vmatpush.bf16.msra.mxu0 0
        %1008 = vmatpush.bf16.msra.mxu0 %v996
        %1009 = vmatmul.bf16.gmra.mxu0 %v999
        %v1010 = vpop.f32.mrf.mxu0
        %v1011 = vadd.f32 0.0, %v1010
        %v1012 = vpop.f32.mrf.mxu0
        %1013 = vdwg.mxu0
        %1015 = vrot.lane.b32.xlu0 %v1011, 24
        %v1016 = vpop.permute.xlu0 %1015
        %vm1018 = vcmask 261312
        %1019 = vst.msk [vmem:[#allocation3] sm:$0xff] %vm1018, %v1016
        %v1020 = vsel %vm736, %v991, -inf
        %v1021 = vrot.slane %v1020, 4
        %v1022 = vmax.f32 %v1020, %v1021
        %v1023 = vrot.slane %v1022, 2
        %v1024 = vmax.f32 %v1022, %v1023
        %v1025 = vrot.slane %v1024, 1
        %v1026 = vmax.f32 %v1024, %v1025
        %v1027 = vsel %vm780, %v1026, 0.0
        %1028 = vadd.xlane.f32.xlu0 %v1027
        %v1029 = vpop.xlane.xlu0 %1028
        %v1030 = vrot.slane %v1029, 4
        %v1031 = vadd.f32 %v1029, %v1030
        %v1032 = vrot.slane %v1031, 2
        %v1033 = vadd.f32 %v1031, %v1032
        %v1034 = vrot.slane %v1033, 1
        %v1035 = vadd.f32 %v1033, %v1034
        %s1036 = vtos %v1035
        %p1037 = scmp.gt.f32.partialorder %s1036, %s956
        %s1038 = scalar_select %p1037, %s1036, %s956
        %s1039 = scalar_select %p1037, 3, %s957
        %1040 = vrot.lane.b32.xlu0 %v793, 96
        %v1041 = vpop.permute.xlu0 %1040
        %1042 = vrot.lane.b32.xlu0 %v715, 96
        %v1043 = vpop.permute.xlu0 %1042
        %v1045 = vsel %vm716, %v1041, 0
        %v1048 = vsel %vm716, %v1043, 0
        %1050 = vmatpush.bf16.xpose.msra.mxu0 0
        %1051 = vmatpush.bf16.xpose.msra.mxu0 0
        %1052 = vmatpush.bf16.xpose.msra.mxu0 0
        %1053 = vmatpush.bf16.xpose.msra.mxu0 0
        %1054 = vmatpush.bf16.xpose.msra.mxu0 0
        %1055 = vmatpush.bf16.xpose.msra.mxu0 0
        %1056 = vmatpush.bf16.xpose.msra.mxu0 0
        %1057 = vmatpush.bf16.xpose.msra.mxu0 %v1048
        %1058 = vmatmul.bf16.gmra.mxu0 %v1045
        %v1059 = vpop.f32.mrf.mxu0
        %v1060 = vadd.f32 0.0, %v1059
        %v1061 = vpop.f32.mrf.mxu0
        %1062 = vdwg.mxu0
        %v1063 = vsel %vm736, %v1060, -inf
        %1064 = vmax.xlane.f32.xlu0 %v1063
        %v1065 = vpop.xlane.xlu0 %1064
        %v1066 = vsub.f32 %v1060, %v1065
        %v1067 = vmul.f32 %v1066, 1.442695
        %v1068 = vpow.pop %v1067
        %v1069 = vsel %vm736, %v1068, 0.0
        %1070 = vadd.xlane.f32.xlu0 %v1069
        %v1071 = vpop.xlane.xlu0 %1070
        %v1072 = vrcp.pop %v1071
        %v1073 = vmul.f32 %v1068, %v1072
        %s1074 = scalar_lea.vmem [#allocation2], 32
        %1075 = vst.msk [vmem:[%s1074] sm:$0xff] %vm736, %v1073
        %v1076 = vpack.c.bf16 %v1073, %v1073
        %1077 = vrot.lane.b32.xlu0 %v754, 96
        %v1078 = vpop.permute.xlu0 %1077
        %v1081 = vsel %vm736, %v1076, 0
        %1083 = vmatpush.bf16.msra.mxu0 0
        %1084 = vmatpush.bf16.msra.mxu0 0
        %1085 = vmatpush.bf16.msra.mxu0 0
        %1086 = vmatpush.bf16.msra.mxu0 0
        %1087 = vmatpush.bf16.msra.mxu0 0
        %1088 = vmatpush.bf16.msra.mxu0 0
        %1089 = vmatpush.bf16.msra.mxu0 0
        %1090 = vmatpush.bf16.msra.mxu0 %v1078
        %1091 = vmatmul.bf16.gmra.mxu0 %v1081
        %v1092 = vpop.f32.mrf.mxu0
        %v1093 = vadd.f32 0.0, %v1092
        %v1094 = vpop.f32.mrf.mxu0
        %1095 = vdwg.mxu0
        %1097 = vrot.lane.b32.xlu0 %v1093, 32
        %v1098 = vpop.permute.xlu0 %1097
        %vm1100 = vcmask 326912
        %1101 = vst.msk [vmem:[#allocation3] sm:$0xff] %vm1100, %v1098
        %v1102 = vsel %vm736, %v1073, -inf
        %v1103 = vrot.slane %v1102, 4
        %v1104 = vmax.f32 %v1102, %v1103
        %v1105 = vrot.slane %v1104, 2
        %v1106 = vmax.f32 %v1104, %v1105
        %v1107 = vrot.slane %v1106, 1
        %v1108 = vmax.f32 %v1106, %v1107
        %v1109 = vsel %vm780, %v1108, 0.0
        %1110 = vadd.xlane.f32.xlu0 %v1109
        %v1111 = vpop.xlane.xlu0 %1110
        %v1112 = vrot.slane %v1111, 4
        %v1113 = vadd.f32 %v1111, %v1112
        %v1114 = vrot.slane %v1113, 2
        %v1115 = vadd.f32 %v1113, %v1114
        %v1116 = vrot.slane %v1115, 1
        %v1117 = vadd.f32 %v1115, %v1116
        %s1118 = vtos %v1117
        %p1119 = scmp.gt.f32.partialorder %s1118, %s1038
        %s1120 = scalar_select %p1119, %s1118, %s1038
        %s1121 = scalar_select %p1119, 4, %s1039
        %1122 = vrot.lane.b32.xlu0 %v793, 88
        %v1123 = vpop.permute.xlu0 %1122
        %1124 = vrot.lane.b32.xlu0 %v715, 88
        %v1125 = vpop.permute.xlu0 %1124
        %v1127 = vsel %vm716, %v1123, 0
        %v1130 = vsel %vm716, %v1125, 0
        %1132 = vmatpush.bf16.xpose.msra.mxu0 0
        %1133 = vmatpush.bf16.xpose.msra.mxu0 0
        %1134 = vmatpush.bf16.xpose.msra.mxu0 0
        %1135 = vmatpush.bf16.xpose.msra.mxu0 0
        %1136 = vmatpush.bf16.xpose.msra.mxu0 0
        %1137 = vmatpush.bf16.xpose.msra.mxu0 0
        %1138 = vmatpush.bf16.xpose.msra.mxu0 0
        %1139 = vmatpush.bf16.xpose.msra.mxu0 %v1130
        %1140 = vmatmul.bf16.gmra.mxu0 %v1127
        %v1141 = vpop.f32.mrf.mxu0
        %v1142 = vadd.f32 0.0, %v1141
        %v1143 = vpop.f32.mrf.mxu0
        %1144 = vdwg.mxu0
        %v1145 = vsel %vm736, %v1142, -inf
        %1146 = vmax.xlane.f32.xlu0 %v1145
        %v1147 = vpop.xlane.xlu0 %1146
        %v1148 = vsub.f32 %v1142, %v1147
        %v1149 = vmul.f32 %v1148, 1.442695
        %v1150 = vpow.pop %v1149
        %v1151 = vsel %vm736, %v1150, 0.0
        %1152 = vadd.xlane.f32.xlu0 %v1151
        %v1153 = vpop.xlane.xlu0 %1152
        %v1154 = vrcp.pop %v1153
        %v1155 = vmul.f32 %v1150, %v1154
        %s1156 = scalar_lea.vmem [#allocation2], 40
        %1157 = vst.msk [vmem:[%s1156] sm:$0xff] %vm736, %v1155
        %v1158 = vpack.c.bf16 %v1155, %v1155
        %1159 = vrot.lane.b32.xlu0 %v754, 88
        %v1160 = vpop.permute.xlu0 %1159
        %v1163 = vsel %vm736, %v1158, 0
        %1165 = vmatpush.bf16.msra.mxu0 0
        %1166 = vmatpush.bf16.msra.mxu0 0
        %1167 = vmatpush.bf16.msra.mxu0 0
        %1168 = vmatpush.bf16.msra.mxu0 0
        %1169 = vmatpush.bf16.msra.mxu0 0
        %1170 = vmatpush.bf16.msra.mxu0 0
        %1171 = vmatpush.bf16.msra.mxu0 0
        %1172 = vmatpush.bf16.msra.mxu0 %v1160
        %1173 = vmatmul.bf16.gmra.mxu0 %v1163
        %v1174 = vpop.f32.mrf.mxu0
        %v1175 = vadd.f32 0.0, %v1174
        %v1176 = vpop.f32.mrf.mxu0
        %1177 = vdwg.mxu0
        %1179 = vrot.lane.b32.xlu0 %v1175, 40
        %v1180 = vpop.permute.xlu0 %1179
        %vm1182 = vcmask 392512
        %1183 = vst.msk [vmem:[#allocation3] sm:$0xff] %vm1182, %v1180
        %v1184 = vsel %vm736, %v1155, -inf
        %v1185 = vrot.slane %v1184, 4
        %v1186 = vmax.f32 %v1184, %v1185
        %v1187 = vrot.slane %v1186, 2
        %v1188 = vmax.f32 %v1186, %v1187
        %v1189 = vrot.slane %v1188, 1
        %v1190 = vmax.f32 %v1188, %v1189
        %v1191 = vsel %vm780, %v1190, 0.0
        %1192 = vadd.xlane.f32.xlu0 %v1191
        %v1193 = vpop.xlane.xlu0 %1192
        %v1194 = vrot.slane %v1193, 4
        %v1195 = vadd.f32 %v1193, %v1194
        %v1196 = vrot.slane %v1195, 2
        %v1197 = vadd.f32 %v1195, %v1196
        %v1198 = vrot.slane %v1197, 1
        %v1199 = vadd.f32 %v1197, %v1198
        %s1200 = vtos %v1199
        %p1201 = scmp.gt.f32.partialorder %s1200, %s1120
        %s1202 = scalar_select %p1201, %s1200, %s1120
        %s1203 = scalar_select %p1201, 5, %s1121
        %1204 = vrot.lane.b32.xlu0 %v793, 80
        %v1205 = vpop.permute.xlu0 %1204
        %1206 = vrot.lane.b32.xlu0 %v715, 80
        %v1207 = vpop.permute.xlu0 %1206
        %v1209 = vsel %vm716, %v1205, 0
        %v1212 = vsel %vm716, %v1207, 0
        %1214 = vmatpush.bf16.xpose.msra.mxu0 0
        %1215 = vmatpush.bf16.xpose.msra.mxu0 0
        %1216 = vmatpush.bf16.xpose.msra.mxu0 0
        %1217 = vmatpush.bf16.xpose.msra.mxu0 0
        %1218 = vmatpush.bf16.xpose.msra.mxu0 0
        %1219 = vmatpush.bf16.xpose.msra.mxu0 0
        %1220 = vmatpush.bf16.xpose.msra.mxu0 0
        %1221 = vmatpush.bf16.xpose.msra.mxu0 %v1212
        %1222 = vmatmul.bf16.gmra.mxu0 %v1209
        %v1223 = vpop.f32.mrf.mxu0
        %v1224 = vadd.f32 0.0, %v1223
        %v1225 = vpop.f32.mrf.mxu0
        %1226 = vdwg.mxu0
        %v1227 = vsel %vm736, %v1224, -inf
        %1228 = vmax.xlane.f32.xlu0 %v1227
        %v1229 = vpop.xlane.xlu0 %1228
        %v1230 = vsub.f32 %v1224, %v1229
        %v1231 = vmul.f32 %v1230, 1.442695
        %v1232 = vpow.pop %v1231
        %v1233 = vsel %vm736, %v1232, 0.0
        %1234 = vadd.xlane.f32.xlu0 %v1233
        %v1235 = vpop.xlane.xlu0 %1234
        %v1236 = vrcp.pop %v1235
        %v1237 = vmul.f32 %v1232, %v1236
        %s1238 = scalar_lea.vmem [#allocation2], 48
        %1239 = vst.msk [vmem:[%s1238] sm:$0xff] %vm736, %v1237
        %v1240 = vpack.c.bf16 %v1237, %v1237
        %1241 = vrot.lane.b32.xlu0 %v754, 80
        %v1242 = vpop.permute.xlu0 %1241
        %v1245 = vsel %vm736, %v1240, 0
        %1247 = vmatpush.bf16.msra.mxu0 0
        %1248 = vmatpush.bf16.msra.mxu0 0
        %1249 = vmatpush.bf16.msra.mxu0 0
        %1250 = vmatpush.bf16.msra.mxu0 0
        %1251 = vmatpush.bf16.msra.mxu0 0
        %1252 = vmatpush.bf16.msra.mxu0 0
        %1253 = vmatpush.bf16.msra.mxu0 0
        %1254 = vmatpush.bf16.msra.mxu0 %v1242
        %1255 = vmatmul.bf16.gmra.mxu0 %v1245
        %v1256 = vpop.f32.mrf.mxu0
        %v1257 = vadd.f32 0.0, %v1256
        %v1258 = vpop.f32.mrf.mxu0
        %1259 = vdwg.mxu0
        %1261 = vrot.lane.b32.xlu0 %v1257, 48
        %v1262 = vpop.permute.xlu0 %1261
        %vm1264 = vcmask 458112
        %1265 = vst.msk [vmem:[#allocation3] sm:$0xff] %vm1264, %v1262
        %v1266 = vsel %vm736, %v1237, -inf
        %v1267 = vrot.slane %v1266, 4
        %v1268 = vmax.f32 %v1266, %v1267
        %v1269 = vrot.slane %v1268, 2
        %v1270 = vmax.f32 %v1268, %v1269
        %v1271 = vrot.slane %v1270, 1
        %v1272 = vmax.f32 %v1270, %v1271
        %v1273 = vsel %vm780, %v1272, 0.0
        %1274 = vadd.xlane.f32.xlu0 %v1273
        %v1275 = vpop.xlane.xlu0 %1274
        %v1276 = vrot.slane %v1275, 4
        %v1277 = vadd.f32 %v1275, %v1276
        %v1278 = vrot.slane %v1277, 2
        %v1279 = vadd.f32 %v1277, %v1278
        %v1280 = vrot.slane %v1279, 1
        %v1281 = vadd.f32 %v1279, %v1280
        %s1282 = vtos %v1281
        %p1283 = scmp.gt.f32.partialorder %s1282, %s1202
        %s1284 = scalar_select %p1283, %s1282, %s1202
        %s1285 = scalar_select %p1283, 6, %s1203
        %1286 = vrot.lane.b32.xlu0 %v793, 72
        %v1287 = vpop.permute.xlu0 %1286
        %1288 = vrot.lane.b32.xlu0 %v715, 72
        %v1289 = vpop.permute.xlu0 %1288
        %v1291 = vsel %vm716, %v1287, 0
        %v1294 = vsel %vm716, %v1289, 0
        %1296 = vmatpush.bf16.xpose.msra.mxu0 0
        %1297 = vmatpush.bf16.xpose.msra.mxu0 0
        %1298 = vmatpush.bf16.xpose.msra.mxu0 0
        %1299 = vmatpush.bf16.xpose.msra.mxu0 0
        %1300 = vmatpush.bf16.xpose.msra.mxu0 0
        %1301 = vmatpush.bf16.xpose.msra.mxu0 0
        %1302 = vmatpush.bf16.xpose.msra.mxu0 0
        %1303 = vmatpush.bf16.xpose.msra.mxu0 %v1294
        %1304 = vmatmul.bf16.gmra.mxu0 %v1291
        %v1305 = vpop.f32.mrf.mxu0
        %v1306 = vadd.f32 0.0, %v1305
        %v1307 = vpop.f32.mrf.mxu0
        %1308 = vdwg.mxu0
        %v1309 = vsel %vm736, %v1306, -inf
        %1310 = vmax.xlane.f32.xlu0 %v1309
        %v1311 = vpop.xlane.xlu0 %1310
        %v1312 = vsub.f32 %v1306, %v1311
        %v1313 = vmul.f32 %v1312, 1.442695
        %v1314 = vpow.pop %v1313
        %v1315 = vsel %vm736, %v1314, 0.0
        %1316 = vadd.xlane.f32.xlu0 %v1315
        %v1317 = vpop.xlane.xlu0 %1316
        %v1318 = vrcp.pop %v1317
        %v1319 = vmul.f32 %v1314, %v1318
        %s1320 = scalar_lea.vmem [#allocation2], 56
        %1321 = vst.msk [vmem:[%s1320] sm:$0xff] %vm736, %v1319
        %v1322 = vpack.c.bf16 %v1319, %v1319
        %1323 = vrot.lane.b32.xlu0 %v754, 72
        %v1324 = vpop.permute.xlu0 %1323
        %v1327 = vsel %vm736, %v1322, 0
        %1329 = vmatpush.bf16.msra.mxu0 0
        %1330 = vmatpush.bf16.msra.mxu0 0
        %1331 = vmatpush.bf16.msra.mxu0 0
        %1332 = vmatpush.bf16.msra.mxu0 0
        %1333 = vmatpush.bf16.msra.mxu0 0
        %1334 = vmatpush.bf16.msra.mxu0 0
        %1335 = vmatpush.bf16.msra.mxu0 0
        %1336 = vmatpush.bf16.msra.mxu0 %v1324
        %1337 = vmatmul.bf16.gmra.mxu0 %v1327
        %v1338 = vpop.f32.mrf.mxu0
        %v1339 = vadd.f32 0.0, %v1338
        %v1340 = vpop.f32.mrf.mxu0
        %1341 = vdwg.mxu0
        %1343 = vrot.lane.b32.xlu0 %v1339, 56
        %v1344 = vpop.permute.xlu0 %1343
        %vm1346 = vcmask 523712
        %1347 = vst.msk [vmem:[#allocation3] sm:$0xff] %vm1346, %v1344
        %v1348 = vsel %vm736, %v1319, -inf
        %v1349 = vrot.slane %v1348, 4
        %v1350 = vmax.f32 %v1348, %v1349
        %v1351 = vrot.slane %v1350, 2
        %v1352 = vmax.f32 %v1350, %v1351
        %v1353 = vrot.slane %v1352, 1
        %v1354 = vmax.f32 %v1352, %v1353
        %v1355 = vsel %vm780, %v1354, 0.0
        %1356 = vadd.xlane.f32.xlu0 %v1355
        %v1357 = vpop.xlane.xlu0 %1356
        %v1358 = vrot.slane %v1357, 4
        %v1359 = vadd.f32 %v1357, %v1358
        %v1360 = vrot.slane %v1359, 2
        %v1361 = vadd.f32 %v1359, %v1360
        %v1362 = vrot.slane %v1361, 1
        %v1363 = vadd.f32 %v1361, %v1362
        %s1364 = vtos %v1363
        %p1365 = scmp.gt.f32.partialorder %s1364, %s1284
        %s1366 = scalar_select %p1365, 7, %s1285
        %s1367 = smul.u32 %s1366, 8
        %s1368 = scalar_lea.vmem [#allocation2], %s1367
        %v1369 = vld [vmem:[%s1368] sm:$0xff]
        %1370 = vst.msk [vmem:[%s585] sm:$0xff] %vm736, %v1369
        %v1371 = vld [vmem:[#allocation3] sm:$0xff]
        %v1372 = vpack.c.bf16 %v1371, %v1371
        %v1373 = vld [vmem:[%s9] sm:$0xf]
        %v1374 = vld [vmem:[%s9 + $0x4] sm:$0xf]
        %v1375 = vld [vmem:[%s9 + $0x8] sm:$0xf]
        %v1376 = vld [vmem:[%s9 + $0xc] sm:$0xf]
        %v1377 = vld [vmem:[%s9 + $0x10] sm:$0xf]
        %v1378 = vld [vmem:[%s9 + $0x14] sm:$0xf]
        %v1379 = vld [vmem:[%s9 + $0x18] sm:$0xf]
        %v1380 = vld [vmem:[%s9 + $0x1c] sm:$0xf]
        %v1381 = vld [vmem:[%s10] sm:$0x1]
        %v1383 = vperm.slane %v1381, 0
        %v1393 = vunpack.c.l.b16 %v1373
        %v1394 = vunpack.c.l.b16 %v1374
        %v1395 = vunpack.c.l.b16 %v1375
        %v1396 = vunpack.c.l.b16 %v1376
        %v1397 = vunpack.c.l.b16 %v1377
        %v1398 = vunpack.c.l.b16 %v1378
        %v1399 = vunpack.c.l.b16 %v1379
        %v1400 = vunpack.c.l.b16 %v1380
        %v1401 = vpack.c.b16 %v1394, %v1393
        %v1402 = vpack.c.b16 %v1396, %v1395
        %v1403 = vpack.c.b16 %v1398, %v1397
        %v1404 = vpack.c.b16 %v1400, %v1399
        %vm1409 = vcmask 523264
        %v1411 = vsel %vm1409, %v1372, 0
        %1413 = vmatpush.bf16.msra.mxu0 0
        %1414 = vmatpush.bf16.msra.mxu0 0
        %1415 = vmatpush.bf16.msra.mxu0 0
        %1416 = vmatpush.bf16.msra.mxu0 0
        %1417 = vmatpush.bf16.msra.mxu0 %v1404
        %1418 = vmatpush.bf16.msra.mxu0 %v1403
        %1419 = vmatpush.bf16.msra.mxu0 %v1402
        %1420 = vmatpush.bf16.msra.mxu0 %v1401
        %1421 = vmatmul.bf16.gmra.mxu0 %v1411
        %v1422 = vpop.f32.mrf.mxu0
        %v1423 = vadd.f32 %v1383, %v1422
        %v1424 = vpop.f32.mrf.mxu0
        %1425 = vdwg.mxu0
        %v1426 = vsel %vm615, %v1423, 0.0
        %1427 = vadd.xlane.f32.xlu0 %v1426
        %v1428 = vpop.xlane.xlu0 %1427
        %v1429 = vrcp.pop 32.0
        %v1430 = vmul.f32 32.0, %v1429
        %v1431 = vsub.f32 1.0, %v1430
        %v1432 = vmul.f32 %v1429, %v1431
        %v1433 = vadd.f32 %v1429, %v1432
        %vm1434 = vweird.f32 %v1429
        %v1435 = vsel %vm1434, %v1429, %v1433
        %v1436 = vmul.f32 %v1428, %v1435
        %v1437 = vsub.f32 %v1423, %v1436
        %v1438 = vmul.f32 %v1437, %v1437
        %v1439 = vsel %vm615, %v1438, 0.0
        %1440 = vadd.xlane.f32.xlu0 %v1439
        %v1441 = vpop.xlane.xlu0 %1440
        %v1442 = vmul.f32 %v1441, %v1435
        %v1443 = vadd.f32 %v1442, 1e-05
        %v1444 = vrsqrt.pop %v1443
        %v1445 = vmul.f32 %v1444, %v1443
        %v1446 = vmul.f32 %v1445, %v1444
        %v1447 = vmul.f32 0.5, %v1446
        %v1448 = vsub.f32 1.5, %v1447
        %v1449 = vmul.f32 %v1444, %v1448
        %vm1450 = vweird.f32 %v1443
        %vm1451 = vweird.f32 %v1444
        %vm1452 = vmor %vm1450, %vm1451
        %v1453 = vsel %vm1452, %v1444, %v1449
        %v1454 = vmul.f32 %v1437, %v1453
        %v1455 = vld [vmem:[%s11] sm:$0x1]
        %v1457 = vperm.slane %v1455, 0
        %v1459 = vmul.f32 %v1454, %v1457
        %v1460 = vld [vmem:[%s12] sm:$0x1]
        %v1462 = vperm.slane %v1460, 0
        %v1464 = vadd.f32 %v1459, %v1462
        %1465 = vst.msk [vmem:[%s566] sm:$0xff] %vm615, %v1464
        %s1466 = sand.u32 %s330, 1
        %s1467 = scalar_lea.sflag [#allocation6], %s1466
        %s1468 = sand.u32 %s330, 1
        %s1469 = smul.addr %s1468, 8
        %s1470 = scalar_lea.vmem [#allocation12], %s1469
        %p1471 = scmp.lt.s32.totalorder %s34, 1
        %s1472 = scalar_select %p1471, %s34, 1
        %s1473 = smul.addr %s1472, 8
        %s1474 = scalar_lea.vmem %s14, %s1473
        // Predicated region
        $region89: #{smma_forward.1} parent=71 // pred_check
          %p1475 = pneg %p340
        $region90: #{smma_forward.1} parent=71 // pred_check_branch
          %1477 = sbr.rel (%p1475) target = $region92
        $region91: #{smma_forward.1} parent=71 // pred_region
          %1479 = vsyncadd %s1467, 0
          %s1480 = smul.addr %s34, 8
          %s1481 = scalar_lea.hbm %s13, %s1480
          %s1483 = sshll.u32 %s1470, 4
          %s1484 = int_to_ptr.vmem [resolvable:$true] %s1483
          %s1485 = sshll.u32 %s1481, 4
          %s1486 = int_to_ptr.hbm [resolvable:$true] %s1485
          %1488 = dma.vmem_to_hbm [thread:$0]  %s1484, 128, %s1486, %s1467
        $region92: #{smma_forward.1} parent=71 // pred_fallthru
          _
        // Predicated region
        $region93: #{smma_forward.1} parent=71 // pred_check
          %p1489 = pneg %p366
        $region94: #{smma_forward.1} parent=71 // pred_check_branch
          %1491 = sbr.rel (%p1489) target = $region96
        $region95: #{smma_forward.1} parent=71 // pred_region
          _
        $region96: #{smma_forward.1} parent=71 // pred_fallthru
          _
      $region72: #{smma_forward.1} parent=5 // pred_fallthru
        _
      %p1492 = scmp.le.s32.totalorder 2, %s29
      // Predicated region
      $region97: #{smma_forward.1} parent=5 // pred_check
        %p1493 = pneg %p1492
      $region98: #{smma_forward.1} parent=5 // pred_check_branch
        %1495 = sbr.rel (%p1493) target = $region100
      $region99: #{smma_forward.1} parent=5 // pred_region
        %s1496 = ssub.s32 %s29, 2
        // Predicated region
        $region101: #{smma_forward.1} parent=99 // pred_check
          %p1497 = pneg %p346
        $region102: #{smma_forward.1} parent=99 // pred_check_branch
          %1499 = sbr.rel (%p1497) target = $region104
        $region103: #{smma_forward.1} parent=99 // pred_region
          %s1500 = sand.u32 %s331, 1
          %s1501 = scalar_lea.sflag [#allocation6], %s1500
          %s1502 = sand.u32 %s331, 1
          %s1503 = smul.addr %s1502, 8
          %s1504 = scalar_lea.vmem [#allocation12], %s1503
          %1506 = dma.done %s1501, 128
        $region104: #{smma_forward.1} parent=99 // pred_fallthru
          _
        // Predicated region
        $region105: #{smma_forward.1} parent=99 // pred_check
          %p1507 = pneg %p372
        $region106: #{smma_forward.1} parent=99 // pred_check_branch
          %1509 = sbr.rel (%p1507) target = $region108
        $region107: #{smma_forward.1} parent=99 // pred_region
          %p1510 = scmp.lt.s32.totalorder %s35, 1
          %s1511 = scalar_select %p1510, %s35, 1
          %s1512 = smul.addr %s1511, 8
          %s1513 = scalar_lea.vmem %s14, %s1512
        $region108: #{smma_forward.1} parent=99 // pred_fallthru
          _
      $region100: #{smma_forward.1} parent=5 // pred_fallthru
        _
    $region6: #{smma_forward.1} parent=1 // loop_footer
      %s33 = sadd.s32 1, %s29
    $region7: #{smma_forward.1} parent=1 // loop_footer_branch
      %28 = sbr.rel target = $region3
    $region8: #{smma_forward.1} parent=1 // loop_exit
      _
    %1514 = vsyncpa [#allocation5], 1
    %s1515 = scalar_lea.sflag [#allocation5], 1
    %1516 = vsyncpa %s1515, 1
    %1517 = vsyncpa [#allocation8], 1
    %1518 = vsyncpa [#allocation11], 1
    %1519 = vsyncpa [#allocation6], 1
    %s1520 = scalar_lea.sflag [#allocation6], 1
    %1521 = vsyncpa %s1520, 1

</llo_original>
